<compile_context>
chip_gen: v7x
topology: tpu7x:2x2x1
jax: 0.10.0
libtpu: 0.0.40
codegen_flags: <defaults>
</compile_context>

<pallas_src>
import jax
import jax.numpy as jnp
from jax.experimental import pallas as pl
from jax.experimental.pallas import tpu as pltpu


def _round_up(x, m):
    return ((x + m - 1) // m) * m


def mlp_kernel(x_ref,
               w1t_ref, b1_ref,
               w2t_ref, w3t_ref, w4t_ref, w5_ref,
               o_ref):
    x = x_ref[...]          # [3, tile_n]  f32
    w1t = w1t_ref[...]      # [64, 3]      f32

    # Layer 1: Linear(3, 60) + Tanh  -- K=3 => three broadcast FMAs on the VPU.
    # Padded row 63 has zero weights and bias 20.0, so tanh gives ~1.0 there;
    # after the bf16 cast it is exactly 1.0 and acts as the bias carrier row.
    h = (w1t[:, 0:1] * x[0:1, :]
         + w1t[:, 1:2] * x[1:2, :]
         + w1t[:, 2:3] * x[2:3, :]) + b1_ref[...]
    h = jnp.tanh(h)                                  # [64, tile_n] f32
    h = h.astype(jnp.bfloat16)                       # bf16 operand for the MXU

    # Layer 2: Linear(60, 120) + ReLU   (MXU, bf16 operands, f32 accumulation)
    # b2 is folded into w2t[:, 63]; w2t[127, 63] == 1 re-creates the ones row.
    h = jnp.dot(w2t_ref[...], h, preferred_element_type=jnp.float32)
    h = jnp.maximum(h, 0.0).astype(jnp.bfloat16)     # [128, tile_n]

    # Layer 3: Linear(120, 60) + ReLU   (MXU)  -- b3 folded into w3t[:, 127].
    h = jnp.dot(w3t_ref[...], h, preferred_element_type=jnp.float32)
    h = jnp.maximum(h, 0.0).astype(jnp.bfloat16)     # [64, tile_n]

    # Layer 4: Linear(60, 30) + ReLU    (MXU)  -- b4 folded into w4t[:, 63].
    h = jnp.dot(w4t_ref[...], h, preferred_element_type=jnp.float32)
    h = jnp.maximum(h, 0.0)                          # [32, tile_n] f32, row 31 == 1

    # Layer 5: Linear(30, 1) -- VPU multiply + sublane (XLU) reduce; b5 is
    # folded into w5_ref[31] and picked up by the ones row of h.
    y = jnp.sum(w5_ref[...] * h, axis=0, keepdims=True)   # [1, tile_n] f32

    o_ref[...] = y.astype(o_ref.dtype)


def _prep_params(params):
    """Transpose to [out, in], zero-pad hidden dims to 64/128/64/32, fold all
    biases (b2..b5) into padded weight columns that multiply a 'ones' row, and
    cast the MXU weights to bf16.  Padding is exact: unused padded rows/cols
    stay zero."""
    (w1, b1), (w2, b2), (w3, b3), (w4, b4), (w5, b5) = params
    f32 = jnp.float32

    def pad_wt(w, out_p, in_p):
        # w: [in, out]  ->  zero-padded transpose [out_p, in_p]
        buf = jnp.zeros((out_p, in_p), f32)
        return buf.at[:w.shape[1], :w.shape[0]].set(jnp.asarray(w, f32).T)

    def pad_col(v, out_p):
        v = jnp.reshape(jnp.asarray(v, f32), (-1,))
        return jnp.zeros((out_p, 1), f32).at[:v.shape[0], 0].set(v)

    # Layer 1 (f32, VPU): pad to [64, 3]; bias column [64, 1].
    w1t = pad_wt(w1, 64, 3)
    b1p = pad_col(b1, 64)
    # Bootstrap the ones row: padded channel 63 has zero weights; tanh(20.0)
    # saturates to 1.0 (exactly 1.0 after the bf16 cast).
    b1p = b1p.at[63, 0].set(20.0)

    # Layers 2-4 (bf16 MXU operands): fold bias into the column that multiplies
    # the ones row; a 1.0 in a padded output row propagates the ones row.
    w2t = pad_wt(w2, 128, 64)
    w2t = w2t.at[:w2.shape[1], 63].set(jnp.reshape(jnp.asarray(b2, f32), (-1,)))
    w2t = w2t.at[127, 63].set(1.0)

    w3t = pad_wt(w3, 64, 128)
    w3t = w3t.at[:w3.shape[1], 127].set(jnp.reshape(jnp.asarray(b3, f32), (-1,)))
    w3t = w3t.at[63, 127].set(1.0)

    w4t = pad_wt(w4, 32, 64)
    w4t = w4t.at[:w4.shape[1], 63].set(jnp.reshape(jnp.asarray(b4, f32), (-1,)))
    w4t = w4t.at[31, 63].set(1.0)

    # Layer 5 (f32, VPU+XLU): final weights as a [32,1] column; b5 at row 31.
    w5c = pad_col(w5, 32)
    w5c = w5c.at[31, 0].set(jnp.reshape(jnp.asarray(b5, f32), ()))

    return (w1t, b1p,
            w2t.astype(jnp.bfloat16),
            w3t.astype(jnp.bfloat16),
            w4t.astype(jnp.bfloat16),
            w5c)


def _choose_tile(n, tile_n):
    """Lane-aligned batch tile: multiple of 256, VMEM-safe ceiling 16384 (v7x),
    and >=2 grid steps when the batch allows it (v7x megacore)."""
    n_ceil = _round_up(n, 256)
    t = max(256, min(_round_up(tile_n, 256), 16384, n_ceil))
    steps = -(-n_ceil // t)
    if steps == 1 and n_ceil >= 512:
        steps = 2                       # let "parallel" shard across 2 TCs
    t = _round_up(-(-n_ceil // steps), 256)   # balance tiles, stay 256-aligned
    n_pad = _round_up(n, t)
    return t, n_pad


def mlp_forward(x, params, *, tile_n=8192):
    """x: [N, 3] float32. Returns [N, 1] float32.  Jit this function so the
    pad/transpose below fuses with the surrounding graph."""
    N, in_dim = x.shape
    assert in_dim == 3

    tile, n_pad = _choose_tile(N, tile_n)
    grid = (n_pad // tile,)

    # Feature-major, batch-on-lanes input: [3, n_pad].
    x_t = jnp.pad(jnp.transpose(x.astype(jnp.float32)), ((0, 0), (0, n_pad - N)))

    prep = _prep_params(params)

    in_specs = [pl.BlockSpec((3, tile), lambda i: (0, i))]
    # Grid-invariant full blocks for the (small) parameters.
    # TODO(synk): pack these into a single padded slab / pl.Buffered(1) to cut
    # startup DMA count; kept separate for simplicity (it is ~60 KiB total).
    in_specs += [pl.BlockSpec(p.shape, lambda i: (0, 0)) for p in prep]

    # Rough per-step live-set estimate (f32 + bf16 activations, buffered I/O);
    # raise the scoped VMEM limit (v5e default is only 16 MiB) with headroom,
    # capped well under v7x's 64 MiB physical VMEM.
    vmem_est = 1400 * tile + (2 << 20)
    vmem_limit = int(min(max(2 * vmem_est, 32 << 20), 48 << 20))

    param_bytes = sum(int(p.size) * p.dtype.itemsize for p in prep)
    cost = pl.CostEstimate(
        flops=2 * 16410 * n_pad,            # 3*60+60*120+120*60+60*30+30*1
        transcendentals=64 * n_pad,         # tanh
        bytes_accessed=16 * n_pad + param_bytes,
    )

    out_t = pl.pallas_call(
        mlp_kernel,
        out_shape=jax.ShapeDtypeStruct((1, n_pad), jnp.float32),
        grid_spec=pltpu.PrefetchScalarGridSpec(
            num_scalar_prefetch=0,
            grid=grid,
            in_specs=in_specs,
            out_specs=pl.BlockSpec((1, tile), lambda i: (0, i)),
        ),
        compiler_params=pltpu.CompilerParams(
            dimension_semantics=("parallel",),
            vmem_limit_bytes=vmem_limit),
        cost_estimate=cost,
    )(x_t, *prep)

    # Back to the PyTorch layout [N, 1], dropping batch padding ([1,N]->[N,1]
    # is layout-free under jit).
    return jnp.transpose(out_t[:, :N])


def init_params(key):
    """Deterministic init matching PyTorch nn.Linear default:
    U(-1/sqrt(fan_in), 1/sqrt(fan_in)) for both weight and bias.
    Weights stored as [in, out]; biases as [1, out]."""
    dims = [(3, 60), (60, 120), (120, 60), (60, 30), (30, 1)]
    params = []
    for (fan_in, fan_out) in dims:
        key, kw, kb = jax.random.split(key, 3)
        bound = 1.0 / jnp.sqrt(float(fan_in))
        w = jax.random.uniform(kw, (fan_in, fan_out), jnp.float32, -bound, bound)
        b = jax.random.uniform(kb, (1, fan_out), jnp.float32, -bound, bound)
        params.append((w, b))
    return params


def mlp_reference(x, params):
    (w1, b1), (w2, b2), (w3, b3), (w4, b4), (w5, b5) = params
    h = jnp.tanh(x @ w1 + b1)
    h = jnp.maximum(h @ w2 + b2, 0.0)
    h = jnp.maximum(h @ w3 + b3, 0.0)
    h = jnp.maximum(h @ w4 + b4, 0.0)
    return h @ w5 + b5


if __name__ == "__main__":
    key = jax.random.PRNGKey(0)
    kx, kp = jax.random.split(key)

    # Small demo batch; deliberately NOT a multiple of 256 so batch padding and
    # the 2-step (megacore-friendly) grid path are both exercised.
    N = 700
    x = jax.random.normal(kx, (N, 3), jnp.float32)
    params = init_params(kp)

    fwd = jax.jit(mlp_forward, static_argnames=("tile_n",))
    out = jax.block_until_ready(fwd(x, params, tile_n=8192))

    ref = mlp_reference(x, params)
    assert out.shape == (N, 1)
    # bf16 MXU operands + folded (bf16) biases => relax tolerance vs f32 ref.
    max_err = float(jnp.max(jnp.abs(out - ref)))
    assert jnp.allclose(out, ref, atol=3e-2, rtol=3e-2), (
        f"mismatch vs reference (max abs err {max_err:.4g})")
    print("KERNEL_OK")
</pallas_src>

<mosaic_0001>
module attributes {stable_mosaic.version = 11 : i64} {
  func.func @mlp_kernel(%arg0: i32, %arg1: memref<3x512xf32, #tpu.memory_space<vmem>>, %arg2: memref<64x3xf32, #tpu.memory_space<vmem>>, %arg3: memref<64x1xf32, #tpu.memory_space<vmem>>, %arg4: memref<128x64xbf16, #tpu.memory_space<vmem>>, %arg5: memref<64x128xbf16, #tpu.memory_space<vmem>>, %arg6: memref<32x64xbf16, #tpu.memory_space<vmem>>, %arg7: memref<32x1xf32, #tpu.memory_space<vmem>>, %arg8: memref<1x512xf32, #tpu.memory_space<vmem>>) attributes {dimension_semantics = [#tpu.dimension_semantics<parallel>], iteration_bounds = array<i64: 2>, scalar_prefetch = 0 : i64, scratch_operands = 0 : i64, tpu.core_type = #tpu.core_type<tc>, window_params = [{transform_indices = @transform_0, window_bounds = array<i64: 3, 512>}, {pipeline_mode = #tpu.pipeline_mode<synchronous>, transform_indices = @transform_1, window_bounds = array<i64: 64, 3>}, {pipeline_mode = #tpu.pipeline_mode<synchronous>, transform_indices = @transform_2, window_bounds = array<i64: 64, 1>}, {pipeline_mode = #tpu.pipeline_mode<synchronous>, transform_indices = @transform_3, window_bounds = array<i64: 128, 64>}, {pipeline_mode = #tpu.pipeline_mode<synchronous>, transform_indices = @transform_4, window_bounds = array<i64: 64, 128>}, {pipeline_mode = #tpu.pipeline_mode<synchronous>, transform_indices = @transform_5, window_bounds = array<i64: 32, 64>}, {pipeline_mode = #tpu.pipeline_mode<synchronous>, transform_indices = @transform_6, window_bounds = array<i64: 32, 1>}, {transform_indices = @transform_7, window_bounds = array<i64: 1, 512>}]} {
    %c0 = arith.constant 0 : index
    %c0_0 = arith.constant 0 : index
    %0 = vector.load %arg1[%c0, %c0_0] : memref<3x512xf32, #tpu.memory_space<vmem>>, vector<3x512xf32>
    %c0_1 = arith.constant 0 : index
    %c0_2 = arith.constant 0 : index
    %1 = vector.load %arg2[%c0_1, %c0_2] : memref<64x3xf32, #tpu.memory_space<vmem>>, vector<64x3xf32>
    %2 = vector.extract_strided_slice %1 {offsets = [0, 0], sizes = [64, 1], strides = [1, 1]} : vector<64x3xf32> to vector<64x1xf32>
    %3 = vector.extract_strided_slice %0 {offsets = [0, 0], sizes = [1, 512], strides = [1, 1]} : vector<3x512xf32> to vector<1x512xf32>
    %4 = vector.broadcast %2 : vector<64x1xf32> to vector<64x512xf32>
    %5 = vector.broadcast %3 : vector<1x512xf32> to vector<64x512xf32>
    %6 = arith.mulf %4, %5 : vector<64x512xf32>
    %7 = vector.extract_strided_slice %1 {offsets = [0, 1], sizes = [64, 1], strides = [1, 1]} : vector<64x3xf32> to vector<64x1xf32>
    %8 = vector.extract_strided_slice %0 {offsets = [1, 0], sizes = [1, 512], strides = [1, 1]} : vector<3x512xf32> to vector<1x512xf32>
    %9 = vector.broadcast %7 : vector<64x1xf32> to vector<64x512xf32>
    %10 = vector.broadcast %8 : vector<1x512xf32> to vector<64x512xf32>
    %11 = arith.mulf %9, %10 : vector<64x512xf32>
    %12 = arith.addf %6, %11 : vector<64x512xf32>
    %13 = vector.extract_strided_slice %1 {offsets = [0, 2], sizes = [64, 1], strides = [1, 1]} : vector<64x3xf32> to vector<64x1xf32>
    %14 = vector.extract_strided_slice %0 {offsets = [2, 0], sizes = [1, 512], strides = [1, 1]} : vector<3x512xf32> to vector<1x512xf32>
    %15 = vector.broadcast %13 : vector<64x1xf32> to vector<64x512xf32>
    %16 = vector.broadcast %14 : vector<1x512xf32> to vector<64x512xf32>
    %17 = arith.mulf %15, %16 : vector<64x512xf32>
    %18 = arith.addf %12, %17 : vector<64x512xf32>
    %c0_3 = arith.constant 0 : index
    %c0_4 = arith.constant 0 : index
    %19 = vector.load %arg3[%c0_3, %c0_4] : memref<64x1xf32, #tpu.memory_space<vmem>>, vector<64x1xf32>
    %20 = vector.broadcast %19 : vector<64x1xf32> to vector<64x512xf32>
    %21 = arith.addf %18, %20 : vector<64x512xf32>
    %22 = math.tanh %21 : vector<64x512xf32>
    %23 = arith.truncf %22 : vector<64x512xf32> to vector<64x512xbf16>
    %c0_5 = arith.constant 0 : index
    %c0_6 = arith.constant 0 : index
    %24 = vector.load %arg4[%c0_5, %c0_6] : memref<128x64xbf16, #tpu.memory_space<vmem>>, vector<128x64xbf16>
    %cst = arith.constant dense<0.000000e+00> : vector<128x512xf32>
    %25 = tpu.matmul %24, %23, %cst {dimension_numbers = #tpu.dot_dimension_numbers<[1], [0], [0], [1], [0, 0, 1, 1], [], []>} : vector<128x64xbf16>, vector<64x512xbf16>, vector<128x512xf32> -> vector<128x512xf32>
    %cst_7 = arith.constant 0.000000e+00 : f32
    %26 = vector.broadcast %cst_7 : f32 to vector<128x512xf32>
    %27 = arith.maximumf %25, %26 : vector<128x512xf32>
    %28 = arith.truncf %27 : vector<128x512xf32> to vector<128x512xbf16>
    %c0_8 = arith.constant 0 : index
    %c0_9 = arith.constant 0 : index
    %29 = vector.load %arg5[%c0_8, %c0_9] : memref<64x128xbf16, #tpu.memory_space<vmem>>, vector<64x128xbf16>
    %cst_10 = arith.constant dense<0.000000e+00> : vector<64x512xf32>
    %30 = tpu.matmul %29, %28, %cst_10 {dimension_numbers = #tpu.dot_dimension_numbers<[1], [0], [0], [1], [0, 0, 1, 1], [], []>} : vector<64x128xbf16>, vector<128x512xbf16>, vector<64x512xf32> -> vector<64x512xf32>
    %cst_11 = arith.constant 0.000000e+00 : f32
    %31 = vector.broadcast %cst_11 : f32 to vector<64x512xf32>
    %32 = arith.maximumf %30, %31 : vector<64x512xf32>
    %33 = arith.truncf %32 : vector<64x512xf32> to vector<64x512xbf16>
    %c0_12 = arith.constant 0 : index
    %c0_13 = arith.constant 0 : index
    %34 = vector.load %arg6[%c0_12, %c0_13] : memref<32x64xbf16, #tpu.memory_space<vmem>>, vector<32x64xbf16>
    %cst_14 = arith.constant dense<0.000000e+00> : vector<32x512xf32>
    %35 = tpu.matmul %34, %33, %cst_14 {dimension_numbers = #tpu.dot_dimension_numbers<[1], [0], [0], [1], [0, 0, 1, 1], [], []>} : vector<32x64xbf16>, vector<64x512xbf16>, vector<32x512xf32> -> vector<32x512xf32>
    %cst_15 = arith.constant 0.000000e+00 : f32
    %36 = vector.broadcast %cst_15 : f32 to vector<32x512xf32>
    %37 = arith.maximumf %35, %36 : vector<32x512xf32>
    %c0_16 = arith.constant 0 : index
    %c0_17 = arith.constant 0 : index
    %38 = vector.load %arg7[%c0_16, %c0_17] : memref<32x1xf32, #tpu.memory_space<vmem>>, vector<32x1xf32>
    %39 = vector.broadcast %38 : vector<32x1xf32> to vector<32x512xf32>
    %40 = arith.mulf %39, %37 : vector<32x512xf32>
    %cst_18 = arith.constant dense<0.000000e+00> : vector<512xf32>
    %41 = vector.multi_reduction <add>, %40, %cst_18 [0] : vector<32x512xf32> to vector<512xf32>
    %42 = vector.shape_cast %41 : vector<512xf32> to vector<1x512xf32>
    %c0_19 = arith.constant 0 : index
    %c0_20 = arith.constant 0 : index
    %43 = vector.load %arg8[%c0_19, %c0_20] : memref<1x512xf32, #tpu.memory_space<vmem>>, vector<1x512xf32>
    tpu.vector_store %arg8[%c0_19, %c0_20], %42 {strides = array<i32>} : memref<1x512xf32, #tpu.memory_space<vmem>>, vector<1x512xf32>,
    return
  }
  func.func @transform_0(%arg0: i32) -> (i32, i32) {
    %c0_i32 = arith.constant 0 : i32
    %c0_i32_0 = arith.constant 0 : i32
    return %c0_i32, %arg0 : i32, i32
  }
  func.func @transform_1(%arg0: i32) -> (i32, i32) {
    %c0_i32 = arith.constant 0 : i32
    %c0_i32_0 = arith.constant 0 : i32
    %c0_i32_1 = arith.constant 0 : i32
    return %c0_i32, %c0_i32_0 : i32, i32
  }
  func.func @transform_2(%arg0: i32) -> (i32, i32) {
    %c0_i32 = arith.constant 0 : i32
    %c0_i32_0 = arith.constant 0 : i32
    %c0_i32_1 = arith.constant 0 : i32
    return %c0_i32, %c0_i32_0 : i32, i32
  }
  func.func @transform_3(%arg0: i32) -> (i32, i32) {
    %c0_i32 = arith.constant 0 : i32
    %c0_i32_0 = arith.constant 0 : i32
    %c0_i32_1 = arith.constant 0 : i32
    return %c0_i32, %c0_i32_0 : i32, i32
  }
  func.func @transform_4(%arg0: i32) -> (i32, i32) {
    %c0_i32 = arith.constant 0 : i32
    %c0_i32_0 = arith.constant 0 : i32
    %c0_i32_1 = arith.constant 0 : i32
    return %c0_i32, %c0_i32_0 : i32, i32
  }
  func.func @transform_5(%arg0: i32) -> (i32, i32) {
    %c0_i32 = arith.constant 0 : i32
    %c0_i32_0 = arith.constant 0 : i32
    %c0_i32_1 = arith.constant 0 : i32
    return %c0_i32, %c0_i32_0 : i32, i32
  }
  func.func @transform_6(%arg0: i32) -> (i32, i32) {
    %c0_i32 = arith.constant 0 : i32
    %c0_i32_0 = arith.constant 0 : i32
    %c0_i32_1 = arith.constant 0 : i32
    return %c0_i32, %c0_i32_0 : i32, i32
  }
  func.func @transform_7(%arg0: i32) -> (i32, i32) {
    %c0_i32 = arith.constant 0 : i32
    %c0_i32_0 = arith.constant 0 : i32
    return %c0_i32, %arg0 : i32, i32
  }
}

</mosaic_0001>

<llo_original>
// kernel: mlp_forward.1
$region0: #{mlp_forward.1}
  #allocation0 [shape = 'u32[]', space=smem, size = 0x4, offset = 0x4, fixed_abs, tag = 'smem constant byte address 0x4 - core index']
  #allocation1 [shape = 'u32[144,128]{1,0:T(1,128)}', space=vmem, size = 0x12000, scoped, tag = 'internal scratch']
  %s0 = inlined_call_operand.vmem [shape: f32[3,1024], index: 0, kind: input, shape index: {}]
  %s1 = inlined_call_operand.vmem [shape: f32[64,3], index: 1, kind: input, shape index: {}]
  %s2 = inlined_call_operand.vmem [shape: f32[64,1], index: 2, kind: input, shape index: {}]
  %s3 = inlined_call_operand.vmem [shape: bf16[128,64], index: 3, kind: input, shape index: {}]
  %s4 = inlined_call_operand.vmem [shape: bf16[64,128], index: 4, kind: input, shape index: {}]
  %s5 = inlined_call_operand.vmem [shape: bf16[32,64], index: 5, kind: input, shape index: {}]
  %s6 = inlined_call_operand.vmem [shape: f32[32,1], index: 6, kind: input, shape index: {}]
  %s7 = inlined_call_operand.vmem [shape: f32[1,1024], index: 7, kind: output, shape index: {}]
  %s8 = sld [smem:[#allocation0]]
  $region61: #{mlp_forward.1} parent=0
    _
  %s10 = ssub.s32 1, %s8
  %s11 = scalar_select 0, %s10, %s8
  loop: start=0, step=1, limit=4
  $region2: #{mlp_forward.1} parent=0 // loop_pre_header
    _
  $region3: #{mlp_forward.1} parent=0 // loop_header
    %s13 = sphi 0, %s17
    %p14 = scmp.ge.s32.totalorder %s13, 4
    %s23 = sphi 0, %s25
    %s26 = sphi 0, %s23
    %s27 = sphi 0, %s26
    %s43 = sphi 0, %s27
    %s47 = sphi 0, %s47
    %s49 = sphi 0, %s47
    %s50 = sphi 0, %s49
    %s64 = sphi 0, %s50
    %s68 = sphi 0, %s68
    %s70 = sphi 0, %s68
    %s71 = sphi 0, %s70
    %s85 = sphi 0, %s71
    %s89 = sphi 0, %s89
    %s91 = sphi 0, %s89
    %s92 = sphi 0, %s91
    %s106 = sphi 0, %s92
    %s110 = sphi 0, %s110
    %s112 = sphi 0, %s110
    %s113 = sphi 0, %s112
    %s127 = sphi 0, %s113
    %s131 = sphi 0, %s131
    %s133 = sphi 0, %s131
    %s134 = sphi 0, %s133
    %s148 = sphi 0, %s134
    %s152 = sphi 0, %s152
    %s154 = sphi 0, %s152
    %s155 = sphi 0, %s154
    %s169 = sphi 0, %s155
    %s175 = sphi 0, %s177
    %s178 = sphi 0, %s175
    %s179 = sphi 0, %s178
    %s195 = sphi 0, %s179
  $region4: #{mlp_forward.1} parent=0 // loop_header_branch
    %16 = sbr.rel (%p14) target = $region8
  $region5: #{mlp_forward.1} parent=0 // loop_body
    %s18 = ssub.s32 %s13, 1
    %s19 = ssub.s32 %s13, 2
    %s20 = sadd.s32 %s13, 1
    %s21 = ssub.s32 %s13, %s20
    %p22 = scmp.eq.s32.totalorder %s21, 0
    %s24 = sadd.s32 %s23, 1
    %s25 = scalar_select %p22, %s23, %s24
    %p28 = pneg %p22
    %p29 = scmp.eq.s32.totalorder %s13, 1
    %p30 = por %p28, %p29
    %p31 = scmp.ne.s32.totalorder %s23, %s26
    %p32 = scmp.eq.s32.totalorder %s13, 0
    %p33 = por %p31, %p32
    %p34 = scmp.ne.s32.totalorder %s23, %s26
    %p35 = scmp.eq.s32.totalorder %s18, 1
    %p36 = por %p34, %p35
    %p37 = scmp.ne.s32.totalorder %s26, %s27
    %p38 = scmp.eq.s32.totalorder %s18, 0
    %p39 = por %p37, %p38
    %p40 = scmp.ne.s32.totalorder %s26, %s27
    %p41 = scmp.eq.s32.totalorder %s19, 1
    %p42 = por %p40, %p41
    %p44 = scmp.ne.s32.totalorder %s27, %s43
    %p45 = scmp.eq.s32.totalorder %s19, 0
    %p46 = por %p44, %p45
    %s48 = sadd.s32 %s47, 1
    %p51 = scmp.eq.s32.totalorder %s13, 1
    %p52 = scmp.ne.s32.totalorder %s47, %s49
    %p53 = scmp.eq.s32.totalorder %s13, 0
    %p54 = por %p52, %p53
    %p55 = scmp.ne.s32.totalorder %s47, %s49
    %p56 = scmp.eq.s32.totalorder %s18, 1
    %p57 = por %p55, %p56
    %p58 = scmp.ne.s32.totalorder %s49, %s50
    %p59 = scmp.eq.s32.totalorder %s18, 0
    %p60 = por %p58, %p59
    %p61 = scmp.ne.s32.totalorder %s49, %s50
    %p62 = scmp.eq.s32.totalorder %s19, 1
    %p63 = por %p61, %p62
    %p65 = scmp.ne.s32.totalorder %s50, %s64
    %p66 = scmp.eq.s32.totalorder %s19, 0
    %p67 = por %p65, %p66
    %s69 = sadd.s32 %s68, 1
    %p72 = scmp.eq.s32.totalorder %s13, 1
    %p73 = scmp.ne.s32.totalorder %s68, %s70
    %p74 = scmp.eq.s32.totalorder %s13, 0
    %p75 = por %p73, %p74
    %p76 = scmp.ne.s32.totalorder %s68, %s70
    %p77 = scmp.eq.s32.totalorder %s18, 1
    %p78 = por %p76, %p77
    %p79 = scmp.ne.s32.totalorder %s70, %s71
    %p80 = scmp.eq.s32.totalorder %s18, 0
    %p81 = por %p79, %p80
    %p82 = scmp.ne.s32.totalorder %s70, %s71
    %p83 = scmp.eq.s32.totalorder %s19, 1
    %p84 = por %p82, %p83
    %p86 = scmp.ne.s32.totalorder %s71, %s85
    %p87 = scmp.eq.s32.totalorder %s19, 0
    %p88 = por %p86, %p87
    %s90 = sadd.s32 %s89, 1
    %p93 = scmp.eq.s32.totalorder %s13, 1
    %p94 = scmp.ne.s32.totalorder %s89, %s91
    %p95 = scmp.eq.s32.totalorder %s13, 0
    %p96 = por %p94, %p95
    %p97 = scmp.ne.s32.totalorder %s89, %s91
    %p98 = scmp.eq.s32.totalorder %s18, 1
    %p99 = por %p97, %p98
    %p100 = scmp.ne.s32.totalorder %s91, %s92
    %p101 = scmp.eq.s32.totalorder %s18, 0
    %p102 = por %p100, %p101
    %p103 = scmp.ne.s32.totalorder %s91, %s92
    %p104 = scmp.eq.s32.totalorder %s19, 1
    %p105 = por %p103, %p104
    %p107 = scmp.ne.s32.totalorder %s92, %s106
    %p108 = scmp.eq.s32.totalorder %s19, 0
    %p109 = por %p107, %p108
    %s111 = sadd.s32 %s110, 1
    %p114 = scmp.eq.s32.totalorder %s13, 1
    %p115 = scmp.ne.s32.totalorder %s110, %s112
    %p116 = scmp.eq.s32.totalorder %s13, 0
    %p117 = por %p115, %p116
    %p118 = scmp.ne.s32.totalorder %s110, %s112
    %p119 = scmp.eq.s32.totalorder %s18, 1
    %p120 = por %p118, %p119
    %p121 = scmp.ne.s32.totalorder %s112, %s113
    %p122 = scmp.eq.s32.totalorder %s18, 0
    %p123 = por %p121, %p122
    %p124 = scmp.ne.s32.totalorder %s112, %s113
    %p125 = scmp.eq.s32.totalorder %s19, 1
    %p126 = por %p124, %p125
    %p128 = scmp.ne.s32.totalorder %s113, %s127
    %p129 = scmp.eq.s32.totalorder %s19, 0
    %p130 = por %p128, %p129
    %s132 = sadd.s32 %s131, 1
    %p135 = scmp.eq.s32.totalorder %s13, 1
    %p136 = scmp.ne.s32.totalorder %s131, %s133
    %p137 = scmp.eq.s32.totalorder %s13, 0
    %p138 = por %p136, %p137
    %p139 = scmp.ne.s32.totalorder %s131, %s133
    %p140 = scmp.eq.s32.totalorder %s18, 1
    %p141 = por %p139, %p140
    %p142 = scmp.ne.s32.totalorder %s133, %s134
    %p143 = scmp.eq.s32.totalorder %s18, 0
    %p144 = por %p142, %p143
    %p145 = scmp.ne.s32.totalorder %s133, %s134
    %p146 = scmp.eq.s32.totalorder %s19, 1
    %p147 = por %p145, %p146
    %p149 = scmp.ne.s32.totalorder %s134, %s148
    %p150 = scmp.eq.s32.totalorder %s19, 0
    %p151 = por %p149, %p150
    %s153 = sadd.s32 %s152, 1
    %p156 = scmp.eq.s32.totalorder %s13, 1
    %p157 = scmp.ne.s32.totalorder %s152, %s154
    %p158 = scmp.eq.s32.totalorder %s13, 0
    %p159 = por %p157, %p158
    %p160 = scmp.ne.s32.totalorder %s152, %s154
    %p161 = scmp.eq.s32.totalorder %s18, 1
    %p162 = por %p160, %p161
    %p163 = scmp.ne.s32.totalorder %s154, %s155
    %p164 = scmp.eq.s32.totalorder %s18, 0
    %p165 = por %p163, %p164
    %p166 = scmp.ne.s32.totalorder %s154, %s155
    %p167 = scmp.eq.s32.totalorder %s19, 1
    %p168 = por %p166, %p167
    %p170 = scmp.ne.s32.totalorder %s155, %s169
    %p171 = scmp.eq.s32.totalorder %s19, 0
    %p172 = por %p170, %p171
    %s173 = ssub.s32 %s13, %s20
    %p174 = scmp.eq.s32.totalorder %s173, 0
    %s176 = sadd.s32 %s175, 1
    %s177 = scalar_select %p174, %s175, %s176
    %p180 = pneg %p174
    %p181 = scmp.eq.s32.totalorder %s13, 1
    %p182 = por %p180, %p181
    %p183 = scmp.ne.s32.totalorder %s175, %s178
    %p184 = scmp.eq.s32.totalorder %s13, 0
    %p185 = por %p183, %p184
    %p186 = scmp.ne.s32.totalorder %s175, %s178
    %p187 = scmp.eq.s32.totalorder %s18, 1
    %p188 = por %p186, %p187
    %p189 = scmp.ne.s32.totalorder %s178, %s179
    %p190 = scmp.eq.s32.totalorder %s18, 0
    %p191 = por %p189, %p190
    %p192 = scmp.ne.s32.totalorder %s178, %s179
    %p193 = scmp.eq.s32.totalorder %s19, 1
    %p194 = por %p192, %p193
    %p196 = scmp.ne.s32.totalorder %s179, %s195
    %p197 = scmp.eq.s32.totalorder %s19, 0
    %p198 = por %p196, %p197
    %p199 = scmp.le.s32.totalorder 1, %s13
    %p200 = scmp.lt.s32.totalorder %s13, 3
    %p201 = pnand %p199, %p200
    %p202 = pneg %p201
    // Predicated region
    $region9: #{mlp_forward.1} parent=5 // pred_check
      _
    $region10: #{mlp_forward.1} parent=5 // pred_check_branch
      %204 = sbr.rel (%p201) target = $region12
    $region11: #{mlp_forward.1} parent=5 // pred_region
      %s205 = ssub.s32 %s13, 1
      // Predicated region
      $region13: #{mlp_forward.1} parent=11 // pred_check
        %p206 = pneg %p60
      $region14: #{mlp_forward.1} parent=11 // pred_check_branch
        %208 = sbr.rel (%p206) target = $region16
      $region15: #{mlp_forward.1} parent=11 // pred_region
        _
      $region16: #{mlp_forward.1} parent=11 // pred_fallthru
        _
      // Predicated region
      $region17: #{mlp_forward.1} parent=11 // pred_check
        %p209 = pneg %p81
      $region18: #{mlp_forward.1} parent=11 // pred_check_branch
        %211 = sbr.rel (%p209) target = $region20
      $region19: #{mlp_forward.1} parent=11 // pred_region
        _
      $region20: #{mlp_forward.1} parent=11 // pred_fallthru
        _
      // Predicated region
      $region21: #{mlp_forward.1} parent=11 // pred_check
        %p212 = pneg %p102
      $region22: #{mlp_forward.1} parent=11 // pred_check_branch
        %214 = sbr.rel (%p212) target = $region24
      $region23: #{mlp_forward.1} parent=11 // pred_region
        _
      $region24: #{mlp_forward.1} parent=11 // pred_fallthru
        _
      // Predicated region
      $region25: #{mlp_forward.1} parent=11 // pred_check
        %p215 = pneg %p123
      $region26: #{mlp_forward.1} parent=11 // pred_check_branch
        %217 = sbr.rel (%p215) target = $region28
      $region27: #{mlp_forward.1} parent=11 // pred_region
        _
      $region28: #{mlp_forward.1} parent=11 // pred_fallthru
        _
      // Predicated region
      $region29: #{mlp_forward.1} parent=11 // pred_check
        %p218 = pneg %p144
      $region30: #{mlp_forward.1} parent=11 // pred_check_branch
        %220 = sbr.rel (%p218) target = $region32
      $region31: #{mlp_forward.1} parent=11 // pred_region
        _
      $region32: #{mlp_forward.1} parent=11 // pred_fallthru
        _
      // Predicated region
      $region33: #{mlp_forward.1} parent=11 // pred_check
        %p221 = pneg %p165
      $region34: #{mlp_forward.1} parent=11 // pred_check_branch
        %223 = sbr.rel (%p221) target = $region36
      $region35: #{mlp_forward.1} parent=11 // pred_region
        _
      $region36: #{mlp_forward.1} parent=11 // pred_fallthru
        _
    $region12: #{mlp_forward.1} parent=5 // pred_fallthru
      _
    %p224 = scmp.lt.s32.totalorder %s13, 2
    // Predicated region
    $region37: #{mlp_forward.1} parent=5 // pred_check
      %p225 = pneg %p224
    $region38: #{mlp_forward.1} parent=5 // pred_check_branch
      %227 = sbr.rel (%p225) target = $region40
    $region39: #{mlp_forward.1} parent=5 // pred_region
      // Predicated region
      $region41: #{mlp_forward.1} parent=39 // pred_check
        %p228 = pneg %p33
      $region42: #{mlp_forward.1} parent=39 // pred_check_branch
        %230 = sbr.rel (%p228) target = $region44
      $region43: #{mlp_forward.1} parent=39 // pred_region
        %s231 = smul.u32 4, %s13
        %p232 = scmp.lt.s32.totalorder %s231, 7
        %s233 = scalar_select %p232, %s231, 7
        %s234 = smul.addr %s233, 4
        %s235 = scalar_lea.vmem %s0, %s234
        %s236 = smul.u32 4, %s13
      $region44: #{mlp_forward.1} parent=39 // pred_fallthru
        _
    $region40: #{mlp_forward.1} parent=5 // pred_fallthru
      _
    %p237 = scmp.le.s32.totalorder 1, %s13
    %p238 = scmp.lt.s32.totalorder %s13, 3
    %p239 = pnand %p237, %p238
    %p240 = pneg %p239
    // Predicated region
    $region45: #{mlp_forward.1} parent=5 // pred_check
      _
    $region46: #{mlp_forward.1} parent=5 // pred_check_branch
      %242 = sbr.rel (%p239) target = $region48
    $region47: #{mlp_forward.1} parent=5 // pred_region
      %s243 = ssub.s32 %s13, 1
      %s244 = smul.u32 4, %s18
      %p245 = scmp.lt.s32.totalorder %s244, 7
      %s246 = scalar_select %p245, %s244, 7
      %s247 = smul.addr %s246, 4
      %s248 = scalar_lea.vmem %s0, %s247
      %p249 = pneg %p39
      %p250 = pneg %p36
      %p251 = pneg %p60
      %p252 = pneg %p57
      %p253 = pneg %p81
      %p254 = pneg %p78
      %p255 = pneg %p102
      %p256 = pneg %p99
      %p257 = pneg %p123
      %p258 = pneg %p120
      %p259 = pneg %p144
      %p260 = pneg %p141
      %p261 = pneg %p165
      %p262 = pneg %p162
      %p263 = pneg %p191
      %p264 = pneg %p188
      %s265 = smul.u32 4, %s18
      %p266 = scmp.lt.s32.totalorder %s265, 7
      %s267 = scalar_select %p266, %s265, 7
      %s268 = scalar_lea.vmem %s7, %s267
      %s269 = smul.u32 4, %s18
      %p270 = scmp.lt.s32.totalorder %s269, 7
      %s271 = scalar_select %p270, %s269, 7
      %s272 = smul.addr %s271, 4
      %s273 = scalar_lea.vmem %s0, %s272
      %s274 = smul.u32 4, %s18
      %s275 = smul.u32 4, %s18
      %p276 = scmp.lt.s32.totalorder %s275, 7
      %s277 = scalar_select %p276, %s275, 7
      %s278 = scalar_lea.vmem %s7, %s277
      %s279 = smul.u32 4, %s18
      %v281 = vld [vmem:[%s273] sm:$0x77]
      %v282 = vld [vmem:[%s273 + $0x8] sm:$0x77]
      %v283 = vld [vmem:[%s1] sm:$0xff]
      %v284 = vld [vmem:[%s1 + $0x8] sm:$0xff]
      %v285 = vld [vmem:[%s1 + $0x10] sm:$0xff]
      %v286 = vld [vmem:[%s1 + $0x18] sm:$0xff]
      %v287 = vld [vmem:[%s1 + $0x20] sm:$0xff]
      %v288 = vld [vmem:[%s1 + $0x28] sm:$0xff]
      %v289 = vld [vmem:[%s1 + $0x30] sm:$0xff]
      %v290 = vld [vmem:[%s1 + $0x38] sm:$0xff]
      %292 = vset.pattern.permute.xlu0 0
      %293 = vperm.xlu0 %292, %v283
      %v294 = vpop.permute.xlu0 %293
      %297 = vset.pattern.permute.xlu0 0
      %298 = vperm.xlu0 %297, %v284
      %v299 = vpop.permute.xlu0 %298
      %302 = vset.pattern.permute.xlu0 0
      %303 = vperm.xlu0 %302, %v285
      %v304 = vpop.permute.xlu0 %303
      %307 = vset.pattern.permute.xlu0 0
      %308 = vperm.xlu0 %307, %v286
      %v309 = vpop.permute.xlu0 %308
      %312 = vset.pattern.permute.xlu0 0
      %313 = vperm.xlu0 %312, %v287
      %v314 = vpop.permute.xlu0 %313
      %317 = vset.pattern.permute.xlu0 0
      %318 = vperm.xlu0 %317, %v288
      %v319 = vpop.permute.xlu0 %318
      %322 = vset.pattern.permute.xlu0 0
      %323 = vperm.xlu0 %322, %v289
      %v324 = vpop.permute.xlu0 %323
      %327 = vset.pattern.permute.xlu0 0
      %328 = vperm.xlu0 %327, %v290
      %v329 = vpop.permute.xlu0 %328
      %v333 = vlaneseq
      %v334 = vshrl.u32 %v333, 7
      %v335 = vsub.s32 0, %v334
      %v336 = vrot.slane %v281, %v335
      %v337 = vlaneseq
      %v338 = vshrl.u32 %v337, 7
      %v339 = vsub.s32 4, %v338
      %v340 = vrot.slane %v281, %v339
      %v341 = vlaneseq
      %v342 = vshrl.u32 %v341, 7
      %v343 = vsub.s32 0, %v342
      %v344 = vrot.slane %v282, %v343
      %v345 = vlaneseq
      %v346 = vshrl.u32 %v345, 7
      %v347 = vsub.s32 4, %v346
      %v348 = vrot.slane %v282, %v347
      %v353 = vlaneseq
      %v354 = vshrl.u32 %v353, 7
      %v355 = vsub.s32 0, %v354
      %v356 = vrot.slane %v336, %v355
      %v357 = vlaneseq
      %v358 = vshrl.u32 %v357, 7
      %v359 = vsub.s32 0, %v358
      %v360 = vrot.slane %v340, %v359
      %v361 = vlaneseq
      %v362 = vshrl.u32 %v361, 7
      %v363 = vsub.s32 0, %v362
      %v364 = vrot.slane %v344, %v363
      %v365 = vlaneseq
      %v366 = vshrl.u32 %v365, 7
      %v367 = vsub.s32 0, %v366
      %v368 = vrot.slane %v348, %v367
      %v369 = vmul.f32 %v294, %v356
      %v370 = vmul.f32 %v294, %v360
      %v371 = vmul.f32 %v294, %v364
      %v372 = vmul.f32 %v294, %v368
      %v373 = vmul.f32 %v299, %v356
      %v374 = vmul.f32 %v299, %v360
      %v375 = vmul.f32 %v299, %v364
      %v376 = vmul.f32 %v299, %v368
      %v377 = vmul.f32 %v304, %v356
      %v378 = vmul.f32 %v304, %v360
      %v379 = vmul.f32 %v304, %v364
      %v380 = vmul.f32 %v304, %v368
      %v381 = vmul.f32 %v309, %v356
      %v382 = vmul.f32 %v309, %v360
      %v383 = vmul.f32 %v309, %v364
      %v384 = vmul.f32 %v309, %v368
      %v385 = vmul.f32 %v314, %v356
      %v386 = vmul.f32 %v314, %v360
      %v387 = vmul.f32 %v314, %v364
      %v388 = vmul.f32 %v314, %v368
      %v389 = vmul.f32 %v319, %v356
      %v390 = vmul.f32 %v319, %v360
      %v391 = vmul.f32 %v319, %v364
      %v392 = vmul.f32 %v319, %v368
      %v393 = vmul.f32 %v324, %v356
      %v394 = vmul.f32 %v324, %v360
      %v395 = vmul.f32 %v324, %v364
      %v396 = vmul.f32 %v324, %v368
      %v397 = vmul.f32 %v329, %v356
      %v398 = vmul.f32 %v329, %v360
      %v399 = vmul.f32 %v329, %v364
      %v400 = vmul.f32 %v329, %v368
      %401 = vset.pattern.permute.xlu0 1
      %402 = vperm.xlu0 %401, %v283
      %v403 = vpop.permute.xlu0 %402
      %405 = vset.pattern.permute.xlu0 1
      %406 = vperm.xlu0 %405, %v284
      %v407 = vpop.permute.xlu0 %406
      %409 = vset.pattern.permute.xlu0 1
      %410 = vperm.xlu0 %409, %v285
      %v411 = vpop.permute.xlu0 %410
      %413 = vset.pattern.permute.xlu0 1
      %414 = vperm.xlu0 %413, %v286
      %v415 = vpop.permute.xlu0 %414
      %417 = vset.pattern.permute.xlu0 1
      %418 = vperm.xlu0 %417, %v287
      %v419 = vpop.permute.xlu0 %418
      %421 = vset.pattern.permute.xlu0 1
      %422 = vperm.xlu0 %421, %v288
      %v423 = vpop.permute.xlu0 %422
      %425 = vset.pattern.permute.xlu0 1
      %426 = vperm.xlu0 %425, %v289
      %v427 = vpop.permute.xlu0 %426
      %429 = vset.pattern.permute.xlu0 1
      %430 = vperm.xlu0 %429, %v290
      %v431 = vpop.permute.xlu0 %430
      %v433 = vlaneseq
      %v434 = vshrl.u32 %v433, 7
      %v435 = vsub.s32 1, %v434
      %v436 = vrot.slane %v281, %v435
      %v437 = vlaneseq
      %v438 = vshrl.u32 %v437, 7
      %v439 = vsub.s32 5, %v438
      %v440 = vrot.slane %v281, %v439
      %v441 = vlaneseq
      %v442 = vshrl.u32 %v441, 7
      %v443 = vsub.s32 1, %v442
      %v444 = vrot.slane %v282, %v443
      %v445 = vlaneseq
      %v446 = vshrl.u32 %v445, 7
      %v447 = vsub.s32 5, %v446
      %v448 = vrot.slane %v282, %v447
      %v453 = vlaneseq
      %v454 = vshrl.u32 %v453, 7
      %v455 = vsub.s32 1, %v454
      %v456 = vrot.slane %v436, %v455
      %v457 = vlaneseq
      %v458 = vshrl.u32 %v457, 7
      %v459 = vsub.s32 1, %v458
      %v460 = vrot.slane %v440, %v459
      %v461 = vlaneseq
      %v462 = vshrl.u32 %v461, 7
      %v463 = vsub.s32 1, %v462
      %v464 = vrot.slane %v444, %v463
      %v465 = vlaneseq
      %v466 = vshrl.u32 %v465, 7
      %v467 = vsub.s32 1, %v466
      %v468 = vrot.slane %v448, %v467
      %v469 = vmul.f32 %v403, %v456
      %v470 = vmul.f32 %v403, %v460
      %v471 = vmul.f32 %v403, %v464
      %v472 = vmul.f32 %v403, %v468
      %v473 = vmul.f32 %v407, %v456
      %v474 = vmul.f32 %v407, %v460
      %v475 = vmul.f32 %v407, %v464
      %v476 = vmul.f32 %v407, %v468
      %v477 = vmul.f32 %v411, %v456
      %v478 = vmul.f32 %v411, %v460
      %v479 = vmul.f32 %v411, %v464
      %v480 = vmul.f32 %v411, %v468
      %v481 = vmul.f32 %v415, %v456
      %v482 = vmul.f32 %v415, %v460
      %v483 = vmul.f32 %v415, %v464
      %v484 = vmul.f32 %v415, %v468
      %v485 = vmul.f32 %v419, %v456
      %v486 = vmul.f32 %v419, %v460
      %v487 = vmul.f32 %v419, %v464
      %v488 = vmul.f32 %v419, %v468
      %v489 = vmul.f32 %v423, %v456
      %v490 = vmul.f32 %v423, %v460
      %v491 = vmul.f32 %v423, %v464
      %v492 = vmul.f32 %v423, %v468
      %v493 = vmul.f32 %v427, %v456
      %v494 = vmul.f32 %v427, %v460
      %v495 = vmul.f32 %v427, %v464
      %v496 = vmul.f32 %v427, %v468
      %v497 = vmul.f32 %v431, %v456
      %v498 = vmul.f32 %v431, %v460
      %v499 = vmul.f32 %v431, %v464
      %v500 = vmul.f32 %v431, %v468
      %v501 = vadd.f32 %v369, %v469
      %v502 = vadd.f32 %v370, %v470
      %v503 = vadd.f32 %v371, %v471
      %v504 = vadd.f32 %v372, %v472
      %v505 = vadd.f32 %v373, %v473
      %v506 = vadd.f32 %v374, %v474
      %v507 = vadd.f32 %v375, %v475
      %v508 = vadd.f32 %v376, %v476
      %v509 = vadd.f32 %v377, %v477
      %v510 = vadd.f32 %v378, %v478
      %v511 = vadd.f32 %v379, %v479
      %v512 = vadd.f32 %v380, %v480
      %v513 = vadd.f32 %v381, %v481
      %v514 = vadd.f32 %v382, %v482
      %v515 = vadd.f32 %v383, %v483
      %v516 = vadd.f32 %v384, %v484
      %v517 = vadd.f32 %v385, %v485
      %v518 = vadd.f32 %v386, %v486
      %v519 = vadd.f32 %v387, %v487
      %v520 = vadd.f32 %v388, %v488
      %v521 = vadd.f32 %v389, %v489
      %v522 = vadd.f32 %v390, %v490
      %v523 = vadd.f32 %v391, %v491
      %v524 = vadd.f32 %v392, %v492
      %v525 = vadd.f32 %v393, %v493
      %v526 = vadd.f32 %v394, %v494
      %v527 = vadd.f32 %v395, %v495
      %v528 = vadd.f32 %v396, %v496
      %v529 = vadd.f32 %v397, %v497
      %v530 = vadd.f32 %v398, %v498
      %v531 = vadd.f32 %v399, %v499
      %v532 = vadd.f32 %v400, %v500
      %533 = vset.pattern.permute.xlu0 2
      %534 = vperm.xlu0 %533, %v283
      %v535 = vpop.permute.xlu0 %534
      %537 = vset.pattern.permute.xlu0 2
      %538 = vperm.xlu0 %537, %v284
      %v539 = vpop.permute.xlu0 %538
      %541 = vset.pattern.permute.xlu0 2
      %542 = vperm.xlu0 %541, %v285
      %v543 = vpop.permute.xlu0 %542
      %545 = vset.pattern.permute.xlu0 2
      %546 = vperm.xlu0 %545, %v286
      %v547 = vpop.permute.xlu0 %546
      %549 = vset.pattern.permute.xlu0 2
      %550 = vperm.xlu0 %549, %v287
      %v551 = vpop.permute.xlu0 %550
      %553 = vset.pattern.permute.xlu0 2
      %554 = vperm.xlu0 %553, %v288
      %v555 = vpop.permute.xlu0 %554
      %557 = vset.pattern.permute.xlu0 2
      %558 = vperm.xlu0 %557, %v289
      %v559 = vpop.permute.xlu0 %558
      %561 = vset.pattern.permute.xlu0 2
      %562 = vperm.xlu0 %561, %v290
      %v563 = vpop.permute.xlu0 %562
      %v565 = vlaneseq
      %v566 = vshrl.u32 %v565, 7
      %v567 = vsub.s32 2, %v566
      %v568 = vrot.slane %v281, %v567
      %v569 = vlaneseq
      %v570 = vshrl.u32 %v569, 7
      %v571 = vsub.s32 6, %v570
      %v572 = vrot.slane %v281, %v571
      %v573 = vlaneseq
      %v574 = vshrl.u32 %v573, 7
      %v575 = vsub.s32 2, %v574
      %v576 = vrot.slane %v282, %v575
      %v577 = vlaneseq
      %v578 = vshrl.u32 %v577, 7
      %v579 = vsub.s32 6, %v578
      %v580 = vrot.slane %v282, %v579
      %v585 = vlaneseq
      %v586 = vshrl.u32 %v585, 7
      %v587 = vsub.s32 2, %v586
      %v588 = vrot.slane %v568, %v587
      %v589 = vlaneseq
      %v590 = vshrl.u32 %v589, 7
      %v591 = vsub.s32 2, %v590
      %v592 = vrot.slane %v572, %v591
      %v593 = vlaneseq
      %v594 = vshrl.u32 %v593, 7
      %v595 = vsub.s32 2, %v594
      %v596 = vrot.slane %v576, %v595
      %v597 = vlaneseq
      %v598 = vshrl.u32 %v597, 7
      %v599 = vsub.s32 2, %v598
      %v600 = vrot.slane %v580, %v599
      %v601 = vmul.f32 %v535, %v588
      %v602 = vmul.f32 %v535, %v592
      %v603 = vmul.f32 %v535, %v596
      %v604 = vmul.f32 %v535, %v600
      %v605 = vmul.f32 %v539, %v588
      %v606 = vmul.f32 %v539, %v592
      %v607 = vmul.f32 %v539, %v596
      %v608 = vmul.f32 %v539, %v600
      %v609 = vmul.f32 %v543, %v588
      %v610 = vmul.f32 %v543, %v592
      %v611 = vmul.f32 %v543, %v596
      %v612 = vmul.f32 %v543, %v600
      %v613 = vmul.f32 %v547, %v588
      %v614 = vmul.f32 %v547, %v592
      %v615 = vmul.f32 %v547, %v596
      %v616 = vmul.f32 %v547, %v600
      %v617 = vmul.f32 %v551, %v588
      %v618 = vmul.f32 %v551, %v592
      %v619 = vmul.f32 %v551, %v596
      %v620 = vmul.f32 %v551, %v600
      %v621 = vmul.f32 %v555, %v588
      %v622 = vmul.f32 %v555, %v592
      %v623 = vmul.f32 %v555, %v596
      %v624 = vmul.f32 %v555, %v600
      %v625 = vmul.f32 %v559, %v588
      %v626 = vmul.f32 %v559, %v592
      %v627 = vmul.f32 %v559, %v596
      %v628 = vmul.f32 %v559, %v600
      %v629 = vmul.f32 %v563, %v588
      %v630 = vmul.f32 %v563, %v592
      %v631 = vmul.f32 %v563, %v596
      %v632 = vmul.f32 %v563, %v600
      %v633 = vadd.f32 %v501, %v601
      %v634 = vadd.f32 %v502, %v602
      %v635 = vadd.f32 %v503, %v603
      %v636 = vadd.f32 %v504, %v604
      %v637 = vadd.f32 %v505, %v605
      %v638 = vadd.f32 %v506, %v606
      %v639 = vadd.f32 %v507, %v607
      %v640 = vadd.f32 %v508, %v608
      %v641 = vadd.f32 %v509, %v609
      %v642 = vadd.f32 %v510, %v610
      %v643 = vadd.f32 %v511, %v611
      %v644 = vadd.f32 %v512, %v612
      %v645 = vadd.f32 %v513, %v613
      %v646 = vadd.f32 %v514, %v614
      %v647 = vadd.f32 %v515, %v615
      %v648 = vadd.f32 %v516, %v616
      %v649 = vadd.f32 %v517, %v617
      %v650 = vadd.f32 %v518, %v618
      %v651 = vadd.f32 %v519, %v619
      %v652 = vadd.f32 %v520, %v620
      %v653 = vadd.f32 %v521, %v621
      %v654 = vadd.f32 %v522, %v622
      %v655 = vadd.f32 %v523, %v623
      %v656 = vadd.f32 %v524, %v624
      %v657 = vadd.f32 %v525, %v625
      %v658 = vadd.f32 %v526, %v626
      %v659 = vadd.f32 %v527, %v627
      %v660 = vadd.f32 %v528, %v628
      %v661 = vadd.f32 %v529, %v629
      %v662 = vadd.f32 %v530, %v630
      %v663 = vadd.f32 %v531, %v631
      %v664 = vadd.f32 %v532, %v632
      %v665 = vld [vmem:[%s2] sm:$0xff]
      %v666 = vld [vmem:[%s2 + $0x8] sm:$0xff]
      %v667 = vld [vmem:[%s2 + $0x10] sm:$0xff]
      %v668 = vld [vmem:[%s2 + $0x18] sm:$0xff]
      %v669 = vld [vmem:[%s2 + $0x20] sm:$0xff]
      %v670 = vld [vmem:[%s2 + $0x28] sm:$0xff]
      %v671 = vld [vmem:[%s2 + $0x30] sm:$0xff]
      %v672 = vld [vmem:[%s2 + $0x38] sm:$0xff]
      %674 = vset.pattern.permute.xlu0 0
      %675 = vperm.xlu0 %674, %v665
      %v676 = vpop.permute.xlu0 %675
      %679 = vset.pattern.permute.xlu0 0
      %680 = vperm.xlu0 %679, %v666
      %v681 = vpop.permute.xlu0 %680
      %684 = vset.pattern.permute.xlu0 0
      %685 = vperm.xlu0 %684, %v667
      %v686 = vpop.permute.xlu0 %685
      %689 = vset.pattern.permute.xlu0 0
      %690 = vperm.xlu0 %689, %v668
      %v691 = vpop.permute.xlu0 %690
      %694 = vset.pattern.permute.xlu0 0
      %695 = vperm.xlu0 %694, %v669
      %v696 = vpop.permute.xlu0 %695
      %699 = vset.pattern.permute.xlu0 0
      %700 = vperm.xlu0 %699, %v670
      %v701 = vpop.permute.xlu0 %700
      %704 = vset.pattern.permute.xlu0 0
      %705 = vperm.xlu0 %704, %v671
      %v706 = vpop.permute.xlu0 %705
      %709 = vset.pattern.permute.xlu0 0
      %710 = vperm.xlu0 %709, %v672
      %v711 = vpop.permute.xlu0 %710
      %v713 = vadd.f32 %v633, %v676
      %v714 = vadd.f32 %v634, %v676
      %v715 = vadd.f32 %v635, %v676
      %v716 = vadd.f32 %v636, %v676
      %v717 = vadd.f32 %v637, %v681
      %v718 = vadd.f32 %v638, %v681
      %v719 = vadd.f32 %v639, %v681
      %v720 = vadd.f32 %v640, %v681
      %v721 = vadd.f32 %v641, %v686
      %v722 = vadd.f32 %v642, %v686
      %v723 = vadd.f32 %v643, %v686
      %v724 = vadd.f32 %v644, %v686
      %v725 = vadd.f32 %v645, %v691
      %v726 = vadd.f32 %v646, %v691
      %v727 = vadd.f32 %v647, %v691
      %v728 = vadd.f32 %v648, %v691
      %v729 = vadd.f32 %v649, %v696
      %v730 = vadd.f32 %v650, %v696
      %v731 = vadd.f32 %v651, %v696
      %v732 = vadd.f32 %v652, %v696
      %v733 = vadd.f32 %v653, %v701
      %v734 = vadd.f32 %v654, %v701
      %v735 = vadd.f32 %v655, %v701
      %v736 = vadd.f32 %v656, %v701
      %v737 = vadd.f32 %v657, %v706
      %v738 = vadd.f32 %v658, %v706
      %v739 = vadd.f32 %v659, %v706
      %v740 = vadd.f32 %v660, %v706
      %v741 = vadd.f32 %v661, %v711
      %v742 = vadd.f32 %v662, %v711
      %v743 = vadd.f32 %v663, %v711
      %v744 = vadd.f32 %v664, %v711
      %v745 = vtanh.pop %v713
      %v746 = vtanh.pop %v714
      %v747 = vtanh.pop %v715
      %v748 = vtanh.pop %v716
      %v749 = vtanh.pop %v717
      %v750 = vtanh.pop %v718
      %v751 = vtanh.pop %v719
      %v752 = vtanh.pop %v720
      %v753 = vtanh.pop %v721
      %v754 = vtanh.pop %v722
      %v755 = vtanh.pop %v723
      %v756 = vtanh.pop %v724
      %v757 = vtanh.pop %v725
      %v758 = vtanh.pop %v726
      %v759 = vtanh.pop %v727
      %v760 = vtanh.pop %v728
      %v761 = vtanh.pop %v729
      %v762 = vtanh.pop %v730
      %v763 = vtanh.pop %v731
      %v764 = vtanh.pop %v732
      %v765 = vtanh.pop %v733
      %v766 = vtanh.pop %v734
      %v767 = vtanh.pop %v735
      %v768 = vtanh.pop %v736
      %v769 = vtanh.pop %v737
      %v770 = vtanh.pop %v738
      %v771 = vtanh.pop %v739
      %v772 = vtanh.pop %v740
      %v773 = vtanh.pop %v741
      %v774 = vtanh.pop %v742
      %v775 = vtanh.pop %v743
      %v776 = vtanh.pop %v744
      %v777 = vpack.c.bf16 %v749, %v745
      %v778 = vpack.c.bf16 %v750, %v746
      %v779 = vpack.c.bf16 %v751, %v747
      %v780 = vpack.c.bf16 %v752, %v748
      %v781 = vpack.c.bf16 %v757, %v753
      %v782 = vpack.c.bf16 %v758, %v754
      %v783 = vpack.c.bf16 %v759, %v755
      %v784 = vpack.c.bf16 %v760, %v756
      %v785 = vpack.c.bf16 %v765, %v761
      %v786 = vpack.c.bf16 %v766, %v762
      %v787 = vpack.c.bf16 %v767, %v763
      %v788 = vpack.c.bf16 %v768, %v764
      %v789 = vpack.c.bf16 %v773, %v769
      %v790 = vpack.c.bf16 %v774, %v770
      %v791 = vpack.c.bf16 %v775, %v771
      %v792 = vpack.c.bf16 %v776, %v772
      %v793 = vld [vmem:[%s3] sm:$0xf]
      %v794 = vld [vmem:[%s3 + $0x4] sm:$0xf]
      %v795 = vld [vmem:[%s3 + $0x8] sm:$0xf]
      %v796 = vld [vmem:[%s3 + $0xc] sm:$0xf]
      %v797 = vld [vmem:[%s3 + $0x10] sm:$0xf]
      %v798 = vld [vmem:[%s3 + $0x14] sm:$0xf]
      %v799 = vld [vmem:[%s3 + $0x18] sm:$0xf]
      %v800 = vld [vmem:[%s3 + $0x1c] sm:$0xf]
      %v801 = vld [vmem:[%s3 + $0x20] sm:$0xf]
      %v802 = vld [vmem:[%s3 + $0x24] sm:$0xf]
      %v803 = vld [vmem:[%s3 + $0x28] sm:$0xf]
      %v804 = vld [vmem:[%s3 + $0x2c] sm:$0xf]
      %v805 = vld [vmem:[%s3 + $0x30] sm:$0xf]
      %v806 = vld [vmem:[%s3 + $0x34] sm:$0xf]
      %v807 = vld [vmem:[%s3 + $0x38] sm:$0xf]
      %v808 = vld [vmem:[%s3 + $0x3c] sm:$0xf]
      %v825 = vunpack.c.l.b16 %v793
      %v826 = vunpack.c.l.b16 %v794
      %v827 = vunpack.c.l.b16 %v795
      %v828 = vunpack.c.l.b16 %v796
      %v829 = vunpack.c.l.b16 %v797
      %v830 = vunpack.c.l.b16 %v798
      %v831 = vunpack.c.l.b16 %v799
      %v832 = vunpack.c.l.b16 %v800
      %v833 = vunpack.c.l.b16 %v801
      %v834 = vunpack.c.l.b16 %v802
      %v835 = vunpack.c.l.b16 %v803
      %v836 = vunpack.c.l.b16 %v804
      %v837 = vunpack.c.l.b16 %v805
      %v838 = vunpack.c.l.b16 %v806
      %v839 = vunpack.c.l.b16 %v807
      %v840 = vunpack.c.l.b16 %v808
      %v841 = vpack.c.b16 %v826, %v825
      %v842 = vpack.c.b16 %v828, %v827
      %v843 = vpack.c.b16 %v830, %v829
      %v844 = vpack.c.b16 %v832, %v831
      %v845 = vpack.c.b16 %v834, %v833
      %v846 = vpack.c.b16 %v836, %v835
      %v847 = vpack.c.b16 %v838, %v837
      %v848 = vpack.c.b16 %v840, %v839
      %vm849 = vcmask 523264
      %v851 = vsel %vm849, %v841, 0
      %v854 = vsel %vm849, %v842, 0
      %v857 = vsel %vm849, %v843, 0
      %v860 = vsel %vm849, %v844, 0
      %v863 = vsel %vm849, %v845, 0
      %v866 = vsel %vm849, %v846, 0
      %v869 = vsel %vm849, %v847, 0
      %v872 = vsel %vm849, %v848, 0
      %874 = vmatprep.subr.bf16.mxu0 %v778
      %875 = vmatpush1.bf16.msra.mxu0 %v777
      %876 = vmatprep.subr.bf16.mxu0 %v782
      %877 = vmatpush1.bf16.msra.mxu0 %v781
      %878 = vmatprep.subr.bf16.mxu0 %v786
      %879 = vmatpush1.bf16.msra.mxu0 %v785
      %880 = vmatprep.subr.bf16.mxu0 %v790
      %881 = vmatpush1.bf16.msra.mxu0 %v789
      %882 = vmatprep.subr.bf16.mxu0 0
      %883 = vmatpush1.bf16.msra.mxu0 0
      %884 = vmatprep.subr.bf16.mxu0 0
      %885 = vmatpush1.bf16.msra.mxu0 0
      %886 = vmatprep.subr.bf16.mxu0 0
      %887 = vmatpush1.bf16.msra.mxu0 0
      %888 = vmatprep.subr.bf16.mxu0 0
      %889 = vmatpush1.bf16.msra.mxu0 0
      %890 = vmatprep.subr.bf16.mxu0 0
      %891 = vmatpush1.bf16.msra.mxu0 0
      %892 = vmatprep.subr.bf16.mxu0 0
      %893 = vmatpush1.bf16.msra.mxu0 0
      %894 = vmatprep.subr.bf16.mxu0 0
      %895 = vmatpush1.bf16.msra.mxu0 0
      %896 = vmatprep.subr.bf16.mxu0 0
      %897 = vmatpush1.bf16.msra.mxu0 0
      %898 = vmatprep.subr.bf16.mxu0 0
      %899 = vmatpush1.bf16.msra.mxu0 0
      %900 = vmatprep.subr.bf16.mxu0 0
      %901 = vmatpush1.bf16.msra.mxu0 0
      %902 = vmatprep.subr.bf16.mxu0 0
      %903 = vmatpush1.bf16.msra.mxu0 0
      %904 = vmatprep.subr.bf16.mxu0 0
      %905 = vmatpush1.bf16.msra.mxu0 0
      %906 = vmatprep.mubr.bf16.mxu0 0
      %907 = vmatmul.mubr.bf16.gmra.mrb[0].mxu0 %v851
      %v908 = vpop.f32.mrb[0].mxu0
      %v909 = vadd.f32 0.0, %v908
      %v910 = vpop.f32.mrb[0].mxu0
      %v911 = vadd.f32 0.0, %v910
      %v912 = vpop.f32.mrb[0].mxu0
      %v913 = vadd.f32 0.0, %v912
      %v914 = vpop.f32.mrb[0].mxu0
      %v915 = vadd.f32 0.0, %v914
      %916 = vmatprep.mubr.bf16.mxu0 0
      %917 = vmatmul.mubr.bf16.gmra.mrb[0].mxu0 %v854
      %v918 = vpop.f32.mrb[0].mxu0
      %v919 = vadd.f32 0.0, %v918
      %v920 = vpop.f32.mrb[0].mxu0
      %v921 = vadd.f32 0.0, %v920
      %v922 = vpop.f32.mrb[0].mxu0
      %v923 = vadd.f32 0.0, %v922
      %v924 = vpop.f32.mrb[0].mxu0
      %v925 = vadd.f32 0.0, %v924
      %926 = vmatprep.mubr.bf16.mxu0 0
      %927 = vmatmul.mubr.bf16.gmra.mrb[0].mxu0 %v857
      %v928 = vpop.f32.mrb[0].mxu0
      %v929 = vadd.f32 0.0, %v928
      %v930 = vpop.f32.mrb[0].mxu0
      %v931 = vadd.f32 0.0, %v930
      %v932 = vpop.f32.mrb[0].mxu0
      %v933 = vadd.f32 0.0, %v932
      %v934 = vpop.f32.mrb[0].mxu0
      %v935 = vadd.f32 0.0, %v934
      %936 = vmatprep.mubr.bf16.mxu0 0
      %937 = vmatmul.mubr.bf16.gmra.mrb[0].mxu0 %v860
      %v938 = vpop.f32.mrb[0].mxu0
      %v939 = vadd.f32 0.0, %v938
      %v940 = vpop.f32.mrb[0].mxu0
      %v941 = vadd.f32 0.0, %v940
      %v942 = vpop.f32.mrb[0].mxu0
      %v943 = vadd.f32 0.0, %v942
      %v944 = vpop.f32.mrb[0].mxu0
      %v945 = vadd.f32 0.0, %v944
      %946 = vmatprep.mubr.bf16.mxu0 0
      %947 = vmatmul.mubr.bf16.gmra.mrb[0].mxu0 %v863
      %v948 = vpop.f32.mrb[0].mxu0
      %v949 = vadd.f32 0.0, %v948
      %v950 = vpop.f32.mrb[0].mxu0
      %v951 = vadd.f32 0.0, %v950
      %v952 = vpop.f32.mrb[0].mxu0
      %v953 = vadd.f32 0.0, %v952
      %v954 = vpop.f32.mrb[0].mxu0
      %v955 = vadd.f32 0.0, %v954
      %956 = vmatprep.mubr.bf16.mxu0 0
      %957 = vmatmul.mubr.bf16.gmra.mrb[0].mxu0 %v866
      %v958 = vpop.f32.mrb[0].mxu0
      %v959 = vadd.f32 0.0, %v958
      %v960 = vpop.f32.mrb[0].mxu0
      %v961 = vadd.f32 0.0, %v960
      %v962 = vpop.f32.mrb[0].mxu0
      %v963 = vadd.f32 0.0, %v962
      %v964 = vpop.f32.mrb[0].mxu0
      %v965 = vadd.f32 0.0, %v964
      %966 = vmatprep.mubr.bf16.mxu0 0
      %967 = vmatmul.mubr.bf16.gmra.mrb[0].mxu0 %v869
      %v968 = vpop.f32.mrb[0].mxu0
      %v969 = vadd.f32 0.0, %v968
      %v970 = vpop.f32.mrb[0].mxu0
      %v971 = vadd.f32 0.0, %v970
      %v972 = vpop.f32.mrb[0].mxu0
      %v973 = vadd.f32 0.0, %v972
      %v974 = vpop.f32.mrb[0].mxu0
      %v975 = vadd.f32 0.0, %v974
      %976 = vmatprep.mubr.bf16.mxu0 0
      %977 = vmatmul.mubr.bf16.gmra.mrb[0].mxu0 %v872
      %v978 = vpop.f32.mrb[0].mxu0
      %v979 = vadd.f32 0.0, %v978
      %v980 = vpop.f32.mrb[0].mxu0
      %v981 = vadd.f32 0.0, %v980
      %v982 = vpop.f32.mrb[0].mxu0
      %v983 = vadd.f32 0.0, %v982
      %v984 = vpop.f32.mrb[0].mxu0
      %v985 = vadd.f32 0.0, %v984
      %986 = vdwg.mxu0
      %987 = vmatprep.subr.bf16.mxu0 %v780
      %988 = vmatpush1.bf16.msra.mxu0 %v779
      %989 = vmatprep.subr.bf16.mxu0 %v784
      %990 = vmatpush1.bf16.msra.mxu0 %v783
      %991 = vmatprep.subr.bf16.mxu0 %v788
      %992 = vmatpush1.bf16.msra.mxu0 %v787
      %993 = vmatprep.subr.bf16.mxu0 %v792
      %994 = vmatpush1.bf16.msra.mxu0 %v791
      %995 = vmatprep.subr.bf16.mxu0 0
      %996 = vmatpush1.bf16.msra.mxu0 0
      %997 = vmatprep.subr.bf16.mxu0 0
      %998 = vmatpush1.bf16.msra.mxu0 0
      %999 = vmatprep.subr.bf16.mxu0 0
      %1000 = vmatpush1.bf16.msra.mxu0 0
      %1001 = vmatprep.subr.bf16.mxu0 0
      %1002 = vmatpush1.bf16.msra.mxu0 0
      %1003 = vmatprep.subr.bf16.mxu0 0
      %1004 = vmatpush1.bf16.msra.mxu0 0
      %1005 = vmatprep.subr.bf16.mxu0 0
      %1006 = vmatpush1.bf16.msra.mxu0 0
      %1007 = vmatprep.subr.bf16.mxu0 0
      %1008 = vmatpush1.bf16.msra.mxu0 0
      %1009 = vmatprep.subr.bf16.mxu0 0
      %1010 = vmatpush1.bf16.msra.mxu0 0
      %1011 = vmatprep.subr.bf16.mxu0 0
      %1012 = vmatpush1.bf16.msra.mxu0 0
      %1013 = vmatprep.subr.bf16.mxu0 0
      %1014 = vmatpush1.bf16.msra.mxu0 0
      %1015 = vmatprep.subr.bf16.mxu0 0
      %1016 = vmatpush1.bf16.msra.mxu0 0
      %1017 = vmatprep.subr.bf16.mxu0 0
      %1018 = vmatpush1.bf16.msra.mxu0 0
      %1019 = vmatprep.mubr.bf16.mxu0 0
      %1020 = vmatmul.mubr.bf16.gmra.mrb[0].mxu0 %v851
      %v1021 = vpop.f32.mrb[0].mxu0
      %v1022 = vadd.f32 0.0, %v1021
      %v1023 = vpop.f32.mrb[0].mxu0
      %v1024 = vadd.f32 0.0, %v1023
      %v1025 = vpop.f32.mrb[0].mxu0
      %v1026 = vadd.f32 0.0, %v1025
      %v1027 = vpop.f32.mrb[0].mxu0
      %v1028 = vadd.f32 0.0, %v1027
      %1029 = vmatprep.mubr.bf16.mxu0 0
      %1030 = vmatmul.mubr.bf16.gmra.mrb[0].mxu0 %v854
      %v1031 = vpop.f32.mrb[0].mxu0
      %v1032 = vadd.f32 0.0, %v1031
      %v1033 = vpop.f32.mrb[0].mxu0
      %v1034 = vadd.f32 0.0, %v1033
      %v1035 = vpop.f32.mrb[0].mxu0
      %v1036 = vadd.f32 0.0, %v1035
      %v1037 = vpop.f32.mrb[0].mxu0
      %v1038 = vadd.f32 0.0, %v1037
      %1039 = vmatprep.mubr.bf16.mxu0 0
      %1040 = vmatmul.mubr.bf16.gmra.mrb[0].mxu0 %v857
      %v1041 = vpop.f32.mrb[0].mxu0
      %v1042 = vadd.f32 0.0, %v1041
      %v1043 = vpop.f32.mrb[0].mxu0
      %v1044 = vadd.f32 0.0, %v1043
      %v1045 = vpop.f32.mrb[0].mxu0
      %v1046 = vadd.f32 0.0, %v1045
      %v1047 = vpop.f32.mrb[0].mxu0
      %v1048 = vadd.f32 0.0, %v1047
      %1049 = vmatprep.mubr.bf16.mxu0 0
      %1050 = vmatmul.mubr.bf16.gmra.mrb[0].mxu0 %v860
      %v1051 = vpop.f32.mrb[0].mxu0
      %v1052 = vadd.f32 0.0, %v1051
      %v1053 = vpop.f32.mrb[0].mxu0
      %v1054 = vadd.f32 0.0, %v1053
      %v1055 = vpop.f32.mrb[0].mxu0
      %v1056 = vadd.f32 0.0, %v1055
      %v1057 = vpop.f32.mrb[0].mxu0
      %v1058 = vadd.f32 0.0, %v1057
      %1059 = vmatprep.mubr.bf16.mxu0 0
      %1060 = vmatmul.mubr.bf16.gmra.mrb[0].mxu0 %v863
      %v1061 = vpop.f32.mrb[0].mxu0
      %v1062 = vadd.f32 0.0, %v1061
      %v1063 = vpop.f32.mrb[0].mxu0
      %v1064 = vadd.f32 0.0, %v1063
      %v1065 = vpop.f32.mrb[0].mxu0
      %v1066 = vadd.f32 0.0, %v1065
      %v1067 = vpop.f32.mrb[0].mxu0
      %v1068 = vadd.f32 0.0, %v1067
      %1069 = vmatprep.mubr.bf16.mxu0 0
      %1070 = vmatmul.mubr.bf16.gmra.mrb[0].mxu0 %v866
      %v1071 = vpop.f32.mrb[0].mxu0
      %v1072 = vadd.f32 0.0, %v1071
      %v1073 = vpop.f32.mrb[0].mxu0
      %v1074 = vadd.f32 0.0, %v1073
      %v1075 = vpop.f32.mrb[0].mxu0
      %v1076 = vadd.f32 0.0, %v1075
      %v1077 = vpop.f32.mrb[0].mxu0
      %v1078 = vadd.f32 0.0, %v1077
      %1079 = vmatprep.mubr.bf16.mxu0 0
      %1080 = vmatmul.mubr.bf16.gmra.mrb[0].mxu0 %v869
      %v1081 = vpop.f32.mrb[0].mxu0
      %v1082 = vadd.f32 0.0, %v1081
      %v1083 = vpop.f32.mrb[0].mxu0
      %v1084 = vadd.f32 0.0, %v1083
      %v1085 = vpop.f32.mrb[0].mxu0
      %v1086 = vadd.f32 0.0, %v1085
      %v1087 = vpop.f32.mrb[0].mxu0
      %v1088 = vadd.f32 0.0, %v1087
      %1089 = vmatprep.mubr.bf16.mxu0 0
      %1090 = vmatmul.mubr.bf16.gmra.mrb[0].mxu0 %v872
      %v1091 = vpop.f32.mrb[0].mxu0
      %v1092 = vadd.f32 0.0, %v1091
      %v1093 = vpop.f32.mrb[0].mxu0
      %v1094 = vadd.f32 0.0, %v1093
      %v1095 = vpop.f32.mrb[0].mxu0
      %v1096 = vadd.f32 0.0, %v1095
      %v1097 = vpop.f32.mrb[0].mxu0
      %v1098 = vadd.f32 0.0, %v1097
      %1099 = vdwg.mxu0
      %v1100 = vmax.f32 %v909, 0.0
      %v1101 = vmax.f32 %v911, 0.0
      %v1102 = vmax.f32 %v1022, 0.0
      %v1103 = vmax.f32 %v1024, 0.0
      %v1104 = vmax.f32 %v913, 0.0
      %v1105 = vmax.f32 %v915, 0.0
      %v1106 = vmax.f32 %v1026, 0.0
      %v1107 = vmax.f32 %v1028, 0.0
      %v1108 = vmax.f32 %v919, 0.0
      %v1109 = vmax.f32 %v921, 0.0
      %v1110 = vmax.f32 %v1032, 0.0
      %v1111 = vmax.f32 %v1034, 0.0
      %v1112 = vmax.f32 %v923, 0.0
      %v1113 = vmax.f32 %v925, 0.0
      %v1114 = vmax.f32 %v1036, 0.0
      %v1115 = vmax.f32 %v1038, 0.0
      %v1116 = vmax.f32 %v929, 0.0
      %v1117 = vmax.f32 %v931, 0.0
      %v1118 = vmax.f32 %v1042, 0.0
      %v1119 = vmax.f32 %v1044, 0.0
      %v1120 = vmax.f32 %v933, 0.0
      %v1121 = vmax.f32 %v935, 0.0
      %v1122 = vmax.f32 %v1046, 0.0
      %v1123 = vmax.f32 %v1048, 0.0
      %v1124 = vmax.f32 %v939, 0.0
      %v1125 = vmax.f32 %v941, 0.0
      %v1126 = vmax.f32 %v1052, 0.0
      %v1127 = vmax.f32 %v1054, 0.0
      %v1128 = vmax.f32 %v943, 0.0
      %v1129 = vmax.f32 %v945, 0.0
      %v1130 = vmax.f32 %v1056, 0.0
      %v1131 = vmax.f32 %v1058, 0.0
      %v1132 = vmax.f32 %v949, 0.0
      %v1133 = vmax.f32 %v951, 0.0
      %v1134 = vmax.f32 %v1062, 0.0
      %v1135 = vmax.f32 %v1064, 0.0
      %v1136 = vmax.f32 %v953, 0.0
      %v1137 = vmax.f32 %v955, 0.0
      %v1138 = vmax.f32 %v1066, 0.0
      %v1139 = vmax.f32 %v1068, 0.0
      %v1140 = vmax.f32 %v959, 0.0
      %v1141 = vmax.f32 %v961, 0.0
      %v1142 = vmax.f32 %v1072, 0.0
      %v1143 = vmax.f32 %v1074, 0.0
      %v1144 = vmax.f32 %v963, 0.0
      %v1145 = vmax.f32 %v965, 0.0
      %v1146 = vmax.f32 %v1076, 0.0
      %v1147 = vmax.f32 %v1078, 0.0
      %v1148 = vmax.f32 %v969, 0.0
      %v1149 = vmax.f32 %v971, 0.0
      %v1150 = vmax.f32 %v1082, 0.0
      %v1151 = vmax.f32 %v1084, 0.0
      %v1152 = vmax.f32 %v973, 0.0
      %v1153 = vmax.f32 %v975, 0.0
      %v1154 = vmax.f32 %v1086, 0.0
      %v1155 = vmax.f32 %v1088, 0.0
      %v1156 = vmax.f32 %v979, 0.0
      %v1157 = vmax.f32 %v981, 0.0
      %v1158 = vmax.f32 %v1092, 0.0
      %v1159 = vmax.f32 %v1094, 0.0
      %v1160 = vmax.f32 %v983, 0.0
      %v1161 = vmax.f32 %v985, 0.0
      %v1162 = vmax.f32 %v1096, 0.0
      %v1163 = vmax.f32 %v1098, 0.0
      %v1164 = vpack.c.bf16 %v1104, %v1100
      %v1165 = vpack.c.bf16 %v1105, %v1101
      %v1166 = vpack.c.bf16 %v1106, %v1102
      %v1167 = vpack.c.bf16 %v1107, %v1103
      %v1168 = vpack.c.bf16 %v1112, %v1108
      %v1169 = vpack.c.bf16 %v1113, %v1109
      %v1170 = vpack.c.bf16 %v1114, %v1110
      %v1171 = vpack.c.bf16 %v1115, %v1111
      %v1172 = vpack.c.bf16 %v1120, %v1116
      %v1173 = vpack.c.bf16 %v1121, %v1117
      %v1174 = vpack.c.bf16 %v1122, %v1118
      %v1175 = vpack.c.bf16 %v1123, %v1119
      %v1176 = vpack.c.bf16 %v1128, %v1124
      %v1177 = vpack.c.bf16 %v1129, %v1125
      %v1178 = vpack.c.bf16 %v1130, %v1126
      %v1179 = vpack.c.bf16 %v1131, %v1127
      %v1180 = vpack.c.bf16 %v1136, %v1132
      %v1181 = vpack.c.bf16 %v1137, %v1133
      %v1182 = vpack.c.bf16 %v1138, %v1134
      %v1183 = vpack.c.bf16 %v1139, %v1135
      %v1184 = vpack.c.bf16 %v1144, %v1140
      %v1185 = vpack.c.bf16 %v1145, %v1141
      %v1186 = vpack.c.bf16 %v1146, %v1142
      %v1187 = vpack.c.bf16 %v1147, %v1143
      %v1188 = vpack.c.bf16 %v1152, %v1148
      %v1189 = vpack.c.bf16 %v1153, %v1149
      %v1190 = vpack.c.bf16 %v1154, %v1150
      %v1191 = vpack.c.bf16 %v1155, %v1151
      %v1192 = vpack.c.bf16 %v1160, %v1156
      %v1193 = vpack.c.bf16 %v1161, %v1157
      %v1194 = vpack.c.bf16 %v1162, %v1158
      %v1195 = vpack.c.bf16 %v1163, %v1159
      %v1196 = vld [vmem:[%s4] sm:$0xf]
      %v1197 = vld [vmem:[%s4 + $0x4] sm:$0xf]
      %v1198 = vld [vmem:[%s4 + $0x8] sm:$0xf]
      %v1199 = vld [vmem:[%s4 + $0xc] sm:$0xf]
      %v1200 = vld [vmem:[%s4 + $0x10] sm:$0xf]
      %v1201 = vld [vmem:[%s4 + $0x14] sm:$0xf]
      %v1202 = vld [vmem:[%s4 + $0x18] sm:$0xf]
      %v1203 = vld [vmem:[%s4 + $0x1c] sm:$0xf]
      %v1212 = vunpack.c.l.b16 %v1196
      %v1213 = vunpack.c.l.b16 %v1197
      %v1214 = vunpack.c.l.b16 %v1198
      %v1215 = vunpack.c.l.b16 %v1199
      %v1216 = vunpack.c.l.b16 %v1200
      %v1217 = vunpack.c.l.b16 %v1201
      %v1218 = vunpack.c.l.b16 %v1202
      %v1219 = vunpack.c.l.b16 %v1203
      %v1220 = vpack.c.b16 %v1213, %v1212
      %v1221 = vpack.c.b16 %v1215, %v1214
      %v1222 = vpack.c.b16 %v1217, %v1216
      %v1223 = vpack.c.b16 %v1219, %v1218
      %1228 = vmatprep.subr.bf16.mxu0 %v1165
      %1229 = vmatpush1.bf16.msra.mxu0 %v1164
      %1230 = vmatprep.subr.bf16.mxu0 %v1169
      %1231 = vmatpush1.bf16.msra.mxu0 %v1168
      %1232 = vmatprep.subr.bf16.mxu0 %v1173
      %1233 = vmatpush1.bf16.msra.mxu0 %v1172
      %1234 = vmatprep.subr.bf16.mxu0 %v1177
      %1235 = vmatpush1.bf16.msra.mxu0 %v1176
      %1236 = vmatprep.subr.bf16.mxu0 %v1181
      %1237 = vmatpush1.bf16.msra.mxu0 %v1180
      %1238 = vmatprep.subr.bf16.mxu0 %v1185
      %1239 = vmatpush1.bf16.msra.mxu0 %v1184
      %1240 = vmatprep.subr.bf16.mxu0 %v1189
      %1241 = vmatpush1.bf16.msra.mxu0 %v1188
      %1242 = vmatprep.subr.bf16.mxu0 %v1193
      %1243 = vmatpush1.bf16.msra.mxu0 %v1192
      %1244 = vmatprep.subr.bf16.mxu0 0
      %1245 = vmatpush1.bf16.msra.mxu0 0
      %1246 = vmatprep.subr.bf16.mxu0 0
      %1247 = vmatpush1.bf16.msra.mxu0 0
      %1248 = vmatprep.subr.bf16.mxu0 0
      %1249 = vmatpush1.bf16.msra.mxu0 0
      %1250 = vmatprep.subr.bf16.mxu0 0
      %1251 = vmatpush1.bf16.msra.mxu0 0
      %1252 = vmatprep.subr.bf16.mxu0 0
      %1253 = vmatpush1.bf16.msra.mxu0 0
      %1254 = vmatprep.subr.bf16.mxu0 0
      %1255 = vmatpush1.bf16.msra.mxu0 0
      %1256 = vmatprep.subr.bf16.mxu0 0
      %1257 = vmatpush1.bf16.msra.mxu0 0
      %1258 = vmatprep.subr.bf16.mxu0 0
      %1259 = vmatpush1.bf16.msra.mxu0 0
      %1260 = vmatprep.mubr.bf16.mxu0 0
      %1261 = vmatmul.mubr.bf16.gmra.mrb[0].mxu0 %v1220
      %v1262 = vpop.f32.mrb[0].mxu0
      %v1263 = vadd.f32 0.0, %v1262
      %v1264 = vpop.f32.mrb[0].mxu0
      %v1265 = vadd.f32 0.0, %v1264
      %v1266 = vpop.f32.mrb[0].mxu0
      %v1267 = vadd.f32 0.0, %v1266
      %v1268 = vpop.f32.mrb[0].mxu0
      %v1269 = vadd.f32 0.0, %v1268
      %1270 = vmatprep.mubr.bf16.mxu0 0
      %1271 = vmatmul.mubr.bf16.gmra.mrb[0].mxu0 %v1221
      %v1272 = vpop.f32.mrb[0].mxu0
      %v1273 = vadd.f32 0.0, %v1272
      %v1274 = vpop.f32.mrb[0].mxu0
      %v1275 = vadd.f32 0.0, %v1274
      %v1276 = vpop.f32.mrb[0].mxu0
      %v1277 = vadd.f32 0.0, %v1276
      %v1278 = vpop.f32.mrb[0].mxu0
      %v1279 = vadd.f32 0.0, %v1278
      %1280 = vmatprep.mubr.bf16.mxu0 0
      %1281 = vmatmul.mubr.bf16.gmra.mrb[0].mxu0 %v1222
      %v1282 = vpop.f32.mrb[0].mxu0
      %v1283 = vadd.f32 0.0, %v1282
      %v1284 = vpop.f32.mrb[0].mxu0
      %v1285 = vadd.f32 0.0, %v1284
      %v1286 = vpop.f32.mrb[0].mxu0
      %v1287 = vadd.f32 0.0, %v1286
      %v1288 = vpop.f32.mrb[0].mxu0
      %v1289 = vadd.f32 0.0, %v1288
      %1290 = vmatprep.mubr.bf16.mxu0 0
      %1291 = vmatmul.mubr.bf16.gmra.mrb[0].mxu0 %v1223
      %v1292 = vpop.f32.mrb[0].mxu0
      %v1293 = vadd.f32 0.0, %v1292
      %v1294 = vpop.f32.mrb[0].mxu0
      %v1295 = vadd.f32 0.0, %v1294
      %v1296 = vpop.f32.mrb[0].mxu0
      %v1297 = vadd.f32 0.0, %v1296
      %v1298 = vpop.f32.mrb[0].mxu0
      %v1299 = vadd.f32 0.0, %v1298
      %1300 = vdwg.mxu0
      %1301 = vmatprep.subr.bf16.mxu0 %v1167
      %1302 = vmatpush1.bf16.msra.mxu0 %v1166
      %1303 = vmatprep.subr.bf16.mxu0 %v1171
      %1304 = vmatpush1.bf16.msra.mxu0 %v1170
      %1305 = vmatprep.subr.bf16.mxu0 %v1175
      %1306 = vmatpush1.bf16.msra.mxu0 %v1174
      %1307 = vmatprep.subr.bf16.mxu0 %v1179
      %1308 = vmatpush1.bf16.msra.mxu0 %v1178
      %1309 = vmatprep.subr.bf16.mxu0 %v1183
      %1310 = vmatpush1.bf16.msra.mxu0 %v1182
      %1311 = vmatprep.subr.bf16.mxu0 %v1187
      %1312 = vmatpush1.bf16.msra.mxu0 %v1186
      %1313 = vmatprep.subr.bf16.mxu0 %v1191
      %1314 = vmatpush1.bf16.msra.mxu0 %v1190
      %1315 = vmatprep.subr.bf16.mxu0 %v1195
      %1316 = vmatpush1.bf16.msra.mxu0 %v1194
      %1317 = vmatprep.subr.bf16.mxu0 0
      %1318 = vmatpush1.bf16.msra.mxu0 0
      %1319 = vmatprep.subr.bf16.mxu0 0
      %1320 = vmatpush1.bf16.msra.mxu0 0
      %1321 = vmatprep.subr.bf16.mxu0 0
      %1322 = vmatpush1.bf16.msra.mxu0 0
      %1323 = vmatprep.subr.bf16.mxu0 0
      %1324 = vmatpush1.bf16.msra.mxu0 0
      %1325 = vmatprep.subr.bf16.mxu0 0
      %1326 = vmatpush1.bf16.msra.mxu0 0
      %1327 = vmatprep.subr.bf16.mxu0 0
      %1328 = vmatpush1.bf16.msra.mxu0 0
      %1329 = vmatprep.subr.bf16.mxu0 0
      %1330 = vmatpush1.bf16.msra.mxu0 0
      %1331 = vmatprep.subr.bf16.mxu0 0
      %1332 = vmatpush1.bf16.msra.mxu0 0
      %1333 = vmatprep.mubr.bf16.mxu0 0
      %1334 = vmatmul.mubr.bf16.gmra.mrb[0].mxu0 %v1220
      %v1335 = vpop.f32.mrb[0].mxu0
      %v1336 = vadd.f32 0.0, %v1335
      %v1337 = vpop.f32.mrb[0].mxu0
      %v1338 = vadd.f32 0.0, %v1337
      %v1339 = vpop.f32.mrb[0].mxu0
      %v1340 = vadd.f32 0.0, %v1339
      %v1341 = vpop.f32.mrb[0].mxu0
      %v1342 = vadd.f32 0.0, %v1341
      %1343 = vmatprep.mubr.bf16.mxu0 0
      %1344 = vmatmul.mubr.bf16.gmra.mrb[0].mxu0 %v1221
      %v1345 = vpop.f32.mrb[0].mxu0
      %v1346 = vadd.f32 0.0, %v1345
      %v1347 = vpop.f32.mrb[0].mxu0
      %v1348 = vadd.f32 0.0, %v1347
      %v1349 = vpop.f32.mrb[0].mxu0
      %v1350 = vadd.f32 0.0, %v1349
      %v1351 = vpop.f32.mrb[0].mxu0
      %v1352 = vadd.f32 0.0, %v1351
      %1353 = vmatprep.mubr.bf16.mxu0 0
      %1354 = vmatmul.mubr.bf16.gmra.mrb[0].mxu0 %v1222
      %v1355 = vpop.f32.mrb[0].mxu0
      %v1356 = vadd.f32 0.0, %v1355
      %v1357 = vpop.f32.mrb[0].mxu0
      %v1358 = vadd.f32 0.0, %v1357
      %v1359 = vpop.f32.mrb[0].mxu0
      %v1360 = vadd.f32 0.0, %v1359
      %v1361 = vpop.f32.mrb[0].mxu0
      %v1362 = vadd.f32 0.0, %v1361
      %1363 = vmatprep.mubr.bf16.mxu0 0
      %1364 = vmatmul.mubr.bf16.gmra.mrb[0].mxu0 %v1223
      %v1365 = vpop.f32.mrb[0].mxu0
      %v1366 = vadd.f32 0.0, %v1365
      %v1367 = vpop.f32.mrb[0].mxu0
      %v1368 = vadd.f32 0.0, %v1367
      %v1369 = vpop.f32.mrb[0].mxu0
      %v1370 = vadd.f32 0.0, %v1369
      %v1371 = vpop.f32.mrb[0].mxu0
      %v1372 = vadd.f32 0.0, %v1371
      %1373 = vdwg.mxu0
      %v1374 = vmax.f32 %v1263, 0.0
      %v1375 = vmax.f32 %v1265, 0.0
      %v1376 = vmax.f32 %v1336, 0.0
      %v1377 = vmax.f32 %v1338, 0.0
      %v1378 = vmax.f32 %v1267, 0.0
      %v1379 = vmax.f32 %v1269, 0.0
      %v1380 = vmax.f32 %v1340, 0.0
      %v1381 = vmax.f32 %v1342, 0.0
      %v1382 = vmax.f32 %v1273, 0.0
      %v1383 = vmax.f32 %v1275, 0.0
      %v1384 = vmax.f32 %v1346, 0.0
      %v1385 = vmax.f32 %v1348, 0.0
      %v1386 = vmax.f32 %v1277, 0.0
      %v1387 = vmax.f32 %v1279, 0.0
      %v1388 = vmax.f32 %v1350, 0.0
      %v1389 = vmax.f32 %v1352, 0.0
      %v1390 = vmax.f32 %v1283, 0.0
      %v1391 = vmax.f32 %v1285, 0.0
      %v1392 = vmax.f32 %v1356, 0.0
      %v1393 = vmax.f32 %v1358, 0.0
      %v1394 = vmax.f32 %v1287, 0.0
      %v1395 = vmax.f32 %v1289, 0.0
      %v1396 = vmax.f32 %v1360, 0.0
      %v1397 = vmax.f32 %v1362, 0.0
      %v1398 = vmax.f32 %v1293, 0.0
      %v1399 = vmax.f32 %v1295, 0.0
      %v1400 = vmax.f32 %v1366, 0.0
      %v1401 = vmax.f32 %v1368, 0.0
      %v1402 = vmax.f32 %v1297, 0.0
      %v1403 = vmax.f32 %v1299, 0.0
      %v1404 = vmax.f32 %v1370, 0.0
      %v1405 = vmax.f32 %v1372, 0.0
      %v1406 = vpack.c.bf16 %v1378, %v1374
      %v1407 = vpack.c.bf16 %v1379, %v1375
      %v1408 = vpack.c.bf16 %v1380, %v1376
      %v1409 = vpack.c.bf16 %v1381, %v1377
      %v1410 = vpack.c.bf16 %v1386, %v1382
      %v1411 = vpack.c.bf16 %v1387, %v1383
      %v1412 = vpack.c.bf16 %v1388, %v1384
      %v1413 = vpack.c.bf16 %v1389, %v1385
      %v1414 = vpack.c.bf16 %v1394, %v1390
      %v1415 = vpack.c.bf16 %v1395, %v1391
      %v1416 = vpack.c.bf16 %v1396, %v1392
      %v1417 = vpack.c.bf16 %v1397, %v1393
      %v1418 = vpack.c.bf16 %v1402, %v1398
      %v1419 = vpack.c.bf16 %v1403, %v1399
      %v1420 = vpack.c.bf16 %v1404, %v1400
      %v1421 = vpack.c.bf16 %v1405, %v1401
      %v1422 = vld [vmem:[%s5] sm:$0xf]
      %v1423 = vld [vmem:[%s5 + $0x4] sm:$0xf]
      %v1424 = vld [vmem:[%s5 + $0x8] sm:$0xf]
      %v1425 = vld [vmem:[%s5 + $0xc] sm:$0xf]
      %v1430 = vunpack.c.l.b16 %v1422
      %v1431 = vunpack.c.l.b16 %v1423
      %v1432 = vunpack.c.l.b16 %v1424
      %v1433 = vunpack.c.l.b16 %v1425
      %v1434 = vpack.c.b16 %v1431, %v1430
      %v1435 = vpack.c.b16 %v1433, %v1432
      %v1437 = vsel %vm849, %v1434, 0
      %v1440 = vsel %vm849, %v1435, 0
      %1442 = vmatprep.subr.bf16.mxu0 %v1407
      %1443 = vmatpush1.bf16.msra.mxu0 %v1406
      %1444 = vmatprep.subr.bf16.mxu0 %v1411
      %1445 = vmatpush1.bf16.msra.mxu0 %v1410
      %1446 = vmatprep.subr.bf16.mxu0 %v1415
      %1447 = vmatpush1.bf16.msra.mxu0 %v1414
      %1448 = vmatprep.subr.bf16.mxu0 %v1419
      %1449 = vmatpush1.bf16.msra.mxu0 %v1418
      %1450 = vmatprep.subr.bf16.mxu0 0
      %1451 = vmatpush1.bf16.msra.mxu0 0
      %1452 = vmatprep.subr.bf16.mxu0 0
      %1453 = vmatpush1.bf16.msra.mxu0 0
      %1454 = vmatprep.subr.bf16.mxu0 0
      %1455 = vmatpush1.bf16.msra.mxu0 0
      %1456 = vmatprep.subr.bf16.mxu0 0
      %1457 = vmatpush1.bf16.msra.mxu0 0
      %1458 = vmatprep.subr.bf16.mxu0 0
      %1459 = vmatpush1.bf16.msra.mxu0 0
      %1460 = vmatprep.subr.bf16.mxu0 0
      %1461 = vmatpush1.bf16.msra.mxu0 0
      %1462 = vmatprep.subr.bf16.mxu0 0
      %1463 = vmatpush1.bf16.msra.mxu0 0
      %1464 = vmatprep.subr.bf16.mxu0 0
      %1465 = vmatpush1.bf16.msra.mxu0 0
      %1466 = vmatprep.subr.bf16.mxu0 0
      %1467 = vmatpush1.bf16.msra.mxu0 0
      %1468 = vmatprep.subr.bf16.mxu0 0
      %1469 = vmatpush1.bf16.msra.mxu0 0
      %1470 = vmatprep.subr.bf16.mxu0 0
      %1471 = vmatpush1.bf16.msra.mxu0 0
      %1472 = vmatprep.subr.bf16.mxu0 0
      %1473 = vmatpush1.bf16.msra.mxu0 0
      %1474 = vmatprep.mubr.bf16.mxu0 0
      %1475 = vmatmul.mubr.bf16.gmra.mrb[0].mxu0 %v1437
      %v1476 = vpop.f32.mrb[0].mxu0
      %v1477 = vadd.f32 0.0, %v1476
      %v1478 = vpop.f32.mrb[0].mxu0
      %v1479 = vadd.f32 0.0, %v1478
      %v1480 = vpop.f32.mrb[0].mxu0
      %v1481 = vadd.f32 0.0, %v1480
      %v1482 = vpop.f32.mrb[0].mxu0
      %v1483 = vadd.f32 0.0, %v1482
      %1484 = vmatprep.mubr.bf16.mxu0 0
      %1485 = vmatmul.mubr.bf16.gmra.mrb[0].mxu0 %v1440
      %v1486 = vpop.f32.mrb[0].mxu0
      %v1487 = vadd.f32 0.0, %v1486
      %v1488 = vpop.f32.mrb[0].mxu0
      %v1489 = vadd.f32 0.0, %v1488
      %v1490 = vpop.f32.mrb[0].mxu0
      %v1491 = vadd.f32 0.0, %v1490
      %v1492 = vpop.f32.mrb[0].mxu0
      %v1493 = vadd.f32 0.0, %v1492
      %1494 = vdwg.mxu0
      %1495 = vmatprep.subr.bf16.mxu0 %v1409
      %1496 = vmatpush1.bf16.msra.mxu0 %v1408
      %1497 = vmatprep.subr.bf16.mxu0 %v1413
      %1498 = vmatpush1.bf16.msra.mxu0 %v1412
      %1499 = vmatprep.subr.bf16.mxu0 %v1417
      %1500 = vmatpush1.bf16.msra.mxu0 %v1416
      %1501 = vmatprep.subr.bf16.mxu0 %v1421
      %1502 = vmatpush1.bf16.msra.mxu0 %v1420
      %1503 = vmatprep.subr.bf16.mxu0 0
      %1504 = vmatpush1.bf16.msra.mxu0 0
      %1505 = vmatprep.subr.bf16.mxu0 0
      %1506 = vmatpush1.bf16.msra.mxu0 0
      %1507 = vmatprep.subr.bf16.mxu0 0
      %1508 = vmatpush1.bf16.msra.mxu0 0
      %1509 = vmatprep.subr.bf16.mxu0 0
      %1510 = vmatpush1.bf16.msra.mxu0 0
      %1511 = vmatprep.subr.bf16.mxu0 0
      %1512 = vmatpush1.bf16.msra.mxu0 0
      %1513 = vmatprep.subr.bf16.mxu0 0
      %1514 = vmatpush1.bf16.msra.mxu0 0
      %1515 = vmatprep.subr.bf16.mxu0 0
      %1516 = vmatpush1.bf16.msra.mxu0 0
      %1517 = vmatprep.subr.bf16.mxu0 0
      %1518 = vmatpush1.bf16.msra.mxu0 0
      %1519 = vmatprep.subr.bf16.mxu0 0
      %1520 = vmatpush1.bf16.msra.mxu0 0
      %1521 = vmatprep.subr.bf16.mxu0 0
      %1522 = vmatpush1.bf16.msra.mxu0 0
      %1523 = vmatprep.subr.bf16.mxu0 0
      %1524 = vmatpush1.bf16.msra.mxu0 0
      %1525 = vmatprep.subr.bf16.mxu0 0
      %1526 = vmatpush1.bf16.msra.mxu0 0
      %1527 = vmatprep.mubr.bf16.mxu0 0
      %1528 = vmatmul.mubr.bf16.gmra.mrb[0].mxu0 %v1437
      %v1529 = vpop.f32.mrb[0].mxu0
      %v1530 = vadd.f32 0.0, %v1529
      %v1531 = vpop.f32.mrb[0].mxu0
      %v1532 = vadd.f32 0.0, %v1531
      %v1533 = vpop.f32.mrb[0].mxu0
      %v1534 = vadd.f32 0.0, %v1533
      %v1535 = vpop.f32.mrb[0].mxu0
      %v1536 = vadd.f32 0.0, %v1535
      %1537 = vmatprep.mubr.bf16.mxu0 0
      %1538 = vmatmul.mubr.bf16.gmra.mrb[0].mxu0 %v1440
      %v1539 = vpop.f32.mrb[0].mxu0
      %v1540 = vadd.f32 0.0, %v1539
      %v1541 = vpop.f32.mrb[0].mxu0
      %v1542 = vadd.f32 0.0, %v1541
      %v1543 = vpop.f32.mrb[0].mxu0
      %v1544 = vadd.f32 0.0, %v1543
      %v1545 = vpop.f32.mrb[0].mxu0
      %v1546 = vadd.f32 0.0, %v1545
      %1547 = vdwg.mxu0
      %v1548 = vmax.f32 %v1477, 0.0
      %v1549 = vmax.f32 %v1479, 0.0
      %v1550 = vmax.f32 %v1530, 0.0
      %v1551 = vmax.f32 %v1532, 0.0
      %v1552 = vmax.f32 %v1481, 0.0
      %v1553 = vmax.f32 %v1483, 0.0
      %v1554 = vmax.f32 %v1534, 0.0
      %v1555 = vmax.f32 %v1536, 0.0
      %v1556 = vmax.f32 %v1487, 0.0
      %v1557 = vmax.f32 %v1489, 0.0
      %v1558 = vmax.f32 %v1540, 0.0
      %v1559 = vmax.f32 %v1542, 0.0
      %v1560 = vmax.f32 %v1491, 0.0
      %v1561 = vmax.f32 %v1493, 0.0
      %v1562 = vmax.f32 %v1544, 0.0
      %v1563 = vmax.f32 %v1546, 0.0
      %v1564 = vld [vmem:[%s6] sm:$0xff]
      %v1565 = vld [vmem:[%s6 + $0x8] sm:$0xff]
      %v1566 = vld [vmem:[%s6 + $0x10] sm:$0xff]
      %v1567 = vld [vmem:[%s6 + $0x18] sm:$0xff]
      %1569 = vset.pattern.permute.xlu0 0
      %1570 = vperm.xlu0 %1569, %v1564
      %v1571 = vpop.permute.xlu0 %1570
      %1574 = vset.pattern.permute.xlu0 0
      %1575 = vperm.xlu0 %1574, %v1565
      %v1576 = vpop.permute.xlu0 %1575
      %1579 = vset.pattern.permute.xlu0 0
      %1580 = vperm.xlu0 %1579, %v1566
      %v1581 = vpop.permute.xlu0 %1580
      %1584 = vset.pattern.permute.xlu0 0
      %1585 = vperm.xlu0 %1584, %v1567
      %v1586 = vpop.permute.xlu0 %1585
      %v1588 = vmul.f32 %v1571, %v1548
      %v1589 = vmul.f32 %v1571, %v1549
      %v1590 = vmul.f32 %v1571, %v1550
      %v1591 = vmul.f32 %v1571, %v1551
      %v1592 = vmul.f32 %v1576, %v1552
      %v1593 = vmul.f32 %v1576, %v1553
      %v1594 = vmul.f32 %v1576, %v1554
      %v1595 = vmul.f32 %v1576, %v1555
      %v1596 = vmul.f32 %v1581, %v1556
      %v1597 = vmul.f32 %v1581, %v1557
      %v1598 = vmul.f32 %v1581, %v1558
      %v1599 = vmul.f32 %v1581, %v1559
      %v1600 = vmul.f32 %v1586, %v1560
      %v1601 = vmul.f32 %v1586, %v1561
      %v1602 = vmul.f32 %v1586, %v1562
      %v1603 = vmul.f32 %v1586, %v1563
      %v1604 = vadd.f32 %v1588, %v1592
      %v1605 = vadd.f32 %v1604, %v1596
      %v1606 = vadd.f32 %v1605, %v1600
      %v1607 = vrot.slane %v1606, 4
      %v1608 = vadd.f32 %v1606, %v1607
      %v1609 = vrot.slane %v1608, 2
      %v1610 = vadd.f32 %v1608, %v1609
      %v1611 = vrot.slane %v1610, 1
      %v1612 = vadd.f32 %v1610, %v1611
      %v1613 = vadd.f32 %v1589, %v1593
      %v1614 = vadd.f32 %v1613, %v1597
      %v1615 = vadd.f32 %v1614, %v1601
      %v1616 = vrot.slane %v1615, 4
      %v1617 = vadd.f32 %v1615, %v1616
      %v1618 = vrot.slane %v1617, 2
      %v1619 = vadd.f32 %v1617, %v1618
      %v1620 = vrot.slane %v1619, 1
      %v1621 = vadd.f32 %v1619, %v1620
      %v1622 = vadd.f32 %v1590, %v1594
      %v1623 = vadd.f32 %v1622, %v1598
      %v1624 = vadd.f32 %v1623, %v1602
      %v1625 = vrot.slane %v1624, 4
      %v1626 = vadd.f32 %v1624, %v1625
      %v1627 = vrot.slane %v1626, 2
      %v1628 = vadd.f32 %v1626, %v1627
      %v1629 = vrot.slane %v1628, 1
      %v1630 = vadd.f32 %v1628, %v1629
      %v1631 = vadd.f32 %v1591, %v1595
      %v1632 = vadd.f32 %v1631, %v1599
      %v1633 = vadd.f32 %v1632, %v1603
      %v1634 = vrot.slane %v1633, 4
      %v1635 = vadd.f32 %v1633, %v1634
      %v1636 = vrot.slane %v1635, 2
      %v1637 = vadd.f32 %v1635, %v1636
      %v1638 = vrot.slane %v1637, 1
      %v1639 = vadd.f32 %v1637, %v1638
      %v1644 = vcombine.low %v1612, %v1621
      %v1645 = vcombine.low %v1630, %v1639
      %v1647 = vunpack.c.l.s4 1966171168
      %v1648 = vunpack.c.0.s8 %v1647
      %v1649 = vlaneseq
      %v1650 = vshrl.u32 %v1649, 7
      %v1651 = vsub.s32 %v1648, %v1650
      %v1652 = vrot.slane %v1644, %v1651
      %v1654 = vunpack.c.l.s4 1966171168
      %v1655 = vunpack.c.0.s8 %v1654
      %v1656 = vlaneseq
      %v1657 = vshrl.u32 %v1656, 7
      %v1658 = vsub.s32 %v1655, %v1657
      %v1659 = vrot.slane %v1645, %v1658
      %v1660 = vcombine.low %v1652, %v1659
      %v1662 = vunpack.c.l.s4 1966171168
      %v1663 = vunpack.c.0.s8 %v1662
      %v1664 = vlaneseq
      %v1665 = vshrl.u32 %v1664, 7
      %v1666 = vsub.s32 %v1663, %v1665
      %v1667 = vrot.slane %v1660, %v1666
      %v1669 = vlaneseq
      %vm1670 = vcmp.ge.s32.totalorder %v1669, 0
      %vm1671 = vcmp.lt.s32.totalorder %v1669, 512
      %vm1672 = vmand %vm1670, %vm1671
      %1673 = vst.msk [vmem:[%s278] sm:$0xf] %vm1672, %v1667
      %s1674 = smul.u32 4, %s18
      %p1675 = scmp.lt.s32.totalorder %s1674, 7
      %s1676 = scalar_select %p1675, %s1674, 7
      %s1677 = scalar_lea.vmem %s7, %s1676
      // Predicated region
      $region49: #{mlp_forward.1} parent=47 // pred_check
        %p1678 = pneg %p188
      $region50: #{mlp_forward.1} parent=47 // pred_check_branch
        %1680 = sbr.rel (%p1678) target = $region52
      $region51: #{mlp_forward.1} parent=47 // pred_region
        %s1681 = smul.u32 4, %s18
      $region52: #{mlp_forward.1} parent=47 // pred_fallthru
        _
    $region48: #{mlp_forward.1} parent=5 // pred_fallthru
      _
    %p1682 = scmp.le.s32.totalorder 2, %s13
    // Predicated region
    $region53: #{mlp_forward.1} parent=5 // pred_check
      %p1683 = pneg %p1682
    $region54: #{mlp_forward.1} parent=5 // pred_check_branch
      %1685 = sbr.rel (%p1683) target = $region56
    $region55: #{mlp_forward.1} parent=5 // pred_region
      %s1686 = ssub.s32 %s13, 2
      // Predicated region
      $region57: #{mlp_forward.1} parent=55 // pred_check
        %p1687 = pneg %p194
      $region58: #{mlp_forward.1} parent=55 // pred_check_branch
        %1689 = sbr.rel (%p1687) target = $region60
      $region59: #{mlp_forward.1} parent=55 // pred_region
        %s1690 = smul.u32 4, %s19
        %p1691 = scmp.lt.s32.totalorder %s1690, 7
        %s1692 = scalar_select %p1691, %s1690, 7
        %s1693 = scalar_lea.vmem %s7, %s1692
      $region60: #{mlp_forward.1} parent=55 // pred_fallthru
        _
    $region56: #{mlp_forward.1} parent=5 // pred_fallthru
      _
  $region6: #{mlp_forward.1} parent=0 // loop_footer
    %s17 = sadd.s32 1, %s13
  $region7: #{mlp_forward.1} parent=0 // loop_footer_branch
    %12 = sbr.rel target = $region3
  $region8: #{mlp_forward.1} parent=0 // loop_exit
    _

</llo_original>
